<compile_context>
chip_gen: v7x
topology: tpu7x:2x2x1
jax: 0.10.0
libtpu: 0.0.40
codegen_flags: <defaults>
</compile_context>

<pallas_src>
import functools

import jax
import jax.numpy as jnp
from jax import lax
from jax.experimental import pallas as pl
from jax.experimental.pallas import tpu as pltpu

_INV_SQRT2 = 0.7071067811865475
_HAS_BUFFERED = hasattr(pl, "Buffered")


def _gelu_erf(x):
    # HuggingFace ACT2FN["gelu"]: exact (erf-based) GELU, computed in f32.
    return 0.5 * x * (1.0 + lax.erf(x * _INV_SQRT2))


def _round_up(x, m):
    return ((x + m - 1) // m) * m


def bert_adapted_output_kernel(
    inter_ref,   # (tm, intermediate)      input dtype (cast to bf16 in-kernel)
    resid_ref,   # (tm, hidden)            input dtype, residual tile
    wd_ref,      # (intermediate, hidden)  bf16  BertOutput.dense weight (in, out)
    wdn_ref,     # (hidden, adapter_p)     bf16  adapter down_project weight
    wup_ref,     # (adapter_p, hidden)     bf16  adapter up_project weight
    vecs_ref,    # (5, hidden)             f32   [b_dense, b_up, gamma, beta, b_down]
    out_ref,     # (tm, hidden)
    *,
    adapter_p,
):
    eps = 1e-12  # torch.nn.LayerNorm default used by BERT
    hidden = out_ref.shape[-1]

    b_dense = vecs_ref[0:1, :]
    b_up    = vecs_ref[1:2, :]
    gamma   = vecs_ref[2:3, :]
    beta    = vecs_ref[3:4, :]
    b_down  = vecs_ref[4:5, :adapter_p]   # static slice of the padded 5th row

    # BertOutput.dense — bf16 x bf16 on the MXU, f32 accumulation.  The cast is
    # a no-op if the activation already arrives in bf16.
    h = jnp.dot(inter_ref[...].astype(jnp.bfloat16), wd_ref[...],
                preferred_element_type=jnp.float32) + b_dense
    # BertOutput.dropout -> identity in eval mode.
    # TODO(synk): training-mode dropout not implemented (eval/inference semantics).

    # AdapterBlock: down-project -> GELU -> up-project; h stays f32 for the
    # residual / LayerNorm path, only the matmul operand is re-cast to bf16.
    d = jnp.dot(h.astype(jnp.bfloat16), wdn_ref[...],
                preferred_element_type=jnp.float32) + b_down
    d = _gelu_erf(d)
    u = jnp.dot(d.astype(jnp.bfloat16), wup_ref[...],
                preferred_element_type=jnp.float32) + b_up

    # adapter residual + BertOutput residual, all in f32.
    y = h + u + resid_ref[...].astype(jnp.float32)

    # Fused single-pass LayerNorm: sum and sum-of-squares, then
    # y * (rsqrt*gamma) + (beta - mean*rsqrt*gamma); no `cent` temp.
    inv_h = 1.0 / hidden
    mean = jnp.sum(y, axis=-1, keepdims=True) * inv_h
    msq  = jnp.sum(y * y, axis=-1, keepdims=True) * inv_h
    var  = jnp.maximum(msq - mean * mean, 0.0)
    g = gamma * lax.rsqrt(var + eps)
    out_ref[...] = (y * g + (beta - mean * g)).astype(out_ref.dtype)


def bert_adapted_output(intermediate_state, input_tensor, params, *, tm=512,
                        out_dtype=None):
    """intermediate_state: [B, S, intermediate], input_tensor: [B, S, hidden]."""
    B, S, inter_dim = intermediate_state.shape
    hidden = input_tensor.shape[-1]
    assert hidden % 128 == 0, "hidden dim must be a multiple of the 128-lane width"

    adapter_dim = params["w_down"].shape[-1]
    adapter_p = max(128, _round_up(adapter_dim, 128))  # full lane width, no extra pad
    assert adapter_p <= hidden, "b_down packing assumes adapter_p <= hidden"
    pa = adapter_p - adapter_dim

    out_dtype = input_tensor.dtype if out_dtype is None else out_dtype
    tokens = B * S

    # Tile selection: as large as requested, but keep >= 2 grid steps so v7x's
    # two TensorCores both get work; tm must be a multiple of 8 (sublanes).
    tm = max(8, min(_round_up(tm, 8), _round_up((tokens + 1) // 2, 8)))
    tokens_p = _round_up(tokens, tm)

    # --- wrapper-side layout plumbing (no dtype casts over the activations) ----
    x2 = intermediate_state.reshape(tokens, inter_dim)
    r2 = input_tensor.reshape(tokens, hidden)
    if tokens_p != tokens:
        x2 = jnp.pad(x2, ((0, tokens_p - tokens), (0, 0)))
        r2 = jnp.pad(r2, ((0, tokens_p - tokens), (0, 0)))

    w_dense = params["w_dense"].astype(jnp.bfloat16)
    # Zero-padding the adapter axis is numerically exact: padded down-cols have
    # zero weight & bias -> gelu(0) = 0, and padded up-rows are zero.
    w_down = jnp.pad(params["w_down"], ((0, 0), (0, pa))).astype(jnp.bfloat16)
    w_up = jnp.pad(params["w_up"], ((0, pa), (0, 0))).astype(jnp.bfloat16)

    # Fuse all five small vectors into a single (5, hidden) f32 operand.
    b_down_row = jnp.zeros((hidden,), jnp.float32).at[:adapter_dim].set(
        params["b_down"].reshape(adapter_dim).astype(jnp.float32))
    vecs = jnp.stack(
        [params["b_dense"].reshape(hidden).astype(jnp.float32),
         params["b_up"].reshape(hidden).astype(jnp.float32),
         params["ln_gamma"].reshape(hidden).astype(jnp.float32),
         params["ln_beta"].reshape(hidden).astype(jnp.float32),
         b_down_row],
        axis=0)

    # --- VMEM budget (generation-aware cap, corrected temps term) --------------
    try:
        vmem_cap = int(pltpu.get_tpu_info().vmem_capacity_bytes)
    except Exception:
        vmem_cap = 64 * 1024 * 1024  # conservative: v7x per-TC size
    vmem_cap_safe = max(16 * 1024 * 1024,
                        min(int(0.8 * vmem_cap), vmem_cap - 12 * 1024 * 1024))

    bf16_b, f32_b = 2, 4
    x_b = jnp.dtype(x2.dtype).itemsize
    r_b = jnp.dtype(r2.dtype).itemsize
    o_b = jnp.dtype(out_dtype).itemsize
    # Deeper x-tile pipeline only where VMEM is plentiful (v5e/v6e: 128 MiB).
    x_depth = 3 if vmem_cap >= 96 * 1024 * 1024 else 2
    w_depth = 1 if _HAS_BUFFERED else 2

    weight_bytes = ((inter_dim * hidden + hidden * adapter_p + adapter_p * hidden)
                    * bf16_b + 5 * hidden * f32_b)
    vmem_needed = (
        x_depth * tm * inter_dim * x_b                     # x tiles
        + 2 * tm * hidden * r_b                            # residual tiles
        + 2 * tm * hidden * o_b                            # output tiles
        + w_depth * weight_bytes                           # resident weights
        + (4 * tm * hidden + 2 * tm * adapter_p) * f32_b   # f32 temps (h,u,y,out,d)
    )
    vmem_limit = int(min(max(int(1.5 * vmem_needed), 32 * 1024 * 1024),
                         vmem_cap_safe))

    # --- advisory cost model ---------------------------------------------------
    flops = (2 * tokens_p * (inter_dim * hidden
                             + hidden * adapter_p
                             + adapter_p * hidden)
             + 12 * tokens_p * hidden)                      # bias/residual/LN
    transcendentals = tokens_p * adapter_p                  # erf in GELU
    bytes_accessed = (x2.size * x_b + r2.size * r_b
                      + w_dense.size * bf16_b + w_down.size * bf16_b
                      + w_up.size * bf16_b + vecs.size * f32_b
                      + tokens_p * hidden * o_b)

    def row_spec(cols, depth=2):
        if _HAS_BUFFERED and depth != 2:
            return pl.BlockSpec((tm, cols), lambda i: (i, 0),
                                pipeline_mode=pl.Buffered(depth))
        return pl.BlockSpec((tm, cols), lambda i: (i, 0))

    def const_spec(shape):
        # Grid-invariant block: fetched once, single-buffered.
        if _HAS_BUFFERED:
            return pl.BlockSpec(shape, lambda i: (0,) * len(shape),
                                pipeline_mode=pl.Buffered(1))
        return pl.BlockSpec(shape, lambda i: (0,) * len(shape))

    kernel = functools.partial(bert_adapted_output_kernel, adapter_p=adapter_p)

    out2 = pl.pallas_call(
        kernel,
        out_shape=jax.ShapeDtypeStruct((tokens_p, hidden), out_dtype),
        grid_spec=pltpu.PrefetchScalarGridSpec(
            num_scalar_prefetch=0,
            grid=(tokens_p // tm,),
            in_specs=[
                row_spec(inter_dim, depth=x_depth),       # intermediate_state tile
                row_spec(hidden),                         # input_tensor tile
                const_spec((inter_dim, hidden)),          # dense W (bf16)
                const_spec((hidden, adapter_p)),          # down W (bf16)
                const_spec((adapter_p, hidden)),          # up W (bf16)
                const_spec((5, hidden)),                  # fused bias / LN vectors
            ],
            out_specs=row_spec(hidden),
        ),
        compiler_params=pltpu.CompilerParams(
            dimension_semantics=("parallel",),
            vmem_limit_bytes=vmem_limit,
        ),
        cost_estimate=pl.CostEstimate(
            flops=flops,
            transcendentals=transcendentals,
            bytes_accessed=bytes_accessed,
        ),
    )(x2, r2, w_dense, w_down, w_up, vecs)

    return out2[:tokens].reshape(B, S, hidden)


def init_params(key, *, intermediate_dim, hidden_dim, adapter_dim, init_range=0.02):
    k1, k2, k3, k4, k5, k6 = jax.random.split(key, 6)
    f32 = jnp.float32
    return {
        # BertOutput.dense: Linear(intermediate -> hidden), stored as (in, out)
        "w_dense": jax.random.normal(k1, (intermediate_dim, hidden_dim), f32) * 0.02,
        "b_dense": jax.random.normal(k4, (hidden_dim,), f32) * 0.02,
        # AdapterBlock.down_project: Linear(hidden -> adapter), normal(std=init_range), bias=0
        "w_down": jax.random.normal(k2, (hidden_dim, adapter_dim), f32) * init_range,
        "b_down": jnp.zeros((adapter_dim,), f32),
        # AdapterBlock.up_project: Linear(adapter -> hidden), normal(std=init_range), bias=0
        "w_up": jax.random.normal(k3, (adapter_dim, hidden_dim), f32) * init_range,
        "b_up": jnp.zeros((hidden_dim,), f32),
        # LayerNorm(hidden): weight ~ 1, bias ~ 0 (perturbed so the test exercises them)
        "ln_gamma": 1.0 + jax.random.normal(k5, (hidden_dim,), f32) * 0.05,
        "ln_beta": jax.random.normal(k6, (hidden_dim,), f32) * 0.05,
    }


if __name__ == "__main__":
    # Small-but-MXU-shaped test: 512 tokens; tm auto-clamps to 256 -> 2 grid steps.
    B, S = 2, 256
    hidden_dim = 128
    intermediate_dim = 512
    adapter_dim = 32

    key = jax.random.PRNGKey(0)
    kx, kr, kp = jax.random.split(key, 3)

    intermediate_state = jax.random.normal(kx, (B, S, intermediate_dim), jnp.float32)
    input_tensor = jax.random.normal(kr, (B, S, hidden_dim), jnp.float32)
    params = init_params(
        kp,
        intermediate_dim=intermediate_dim,
        hidden_dim=hidden_dim,
        adapter_dim=adapter_dim,
        init_range=0.02,
    )

    run = jax.jit(functools.partial(bert_adapted_output, tm=512))
    out = jax.block_until_ready(run(intermediate_state, input_tensor, params))

    # Pure-JAX reference using the same bf16-operand / f32-accumulate recipe.
    def ref(x, r, p):
        bf16 = jnp.bfloat16
        h = jnp.dot(x.astype(bf16), p["w_dense"].astype(bf16),
                    preferred_element_type=jnp.float32) + p["b_dense"]
        d = jnp.dot(h.astype(bf16), p["w_down"].astype(bf16),
                    preferred_element_type=jnp.float32) + p["b_down"]
        d = 0.5 * d * (1.0 + lax.erf(d * _INV_SQRT2))
        u = jnp.dot(d.astype(bf16), p["w_up"].astype(bf16),
                    preferred_element_type=jnp.float32) + p["b_up"]
        y = h + u + r
        mean = y.mean(-1, keepdims=True)
        var = ((y - mean) ** 2).mean(-1, keepdims=True)
        return (y - mean) * lax.rsqrt(var + 1e-12) * p["ln_gamma"] + p["ln_beta"]

    expected = ref(intermediate_state, input_tensor, params)
    err = jnp.max(jnp.abs(out - expected))
    assert jnp.allclose(out, expected, atol=2e-3, rtol=2e-3), f"mismatch, max err={err}"

    print("KERNEL_OK")
</pallas_src>

<mosaic_0001>
module attributes {stable_mosaic.version = 11 : i64} {
  func.func @bert_adapted_output_kernel(%arg0: i32, %arg1: memref<256x512xf32, #tpu.memory_space<vmem>>, %arg2: memref<256x128xf32, #tpu.memory_space<vmem>>, %arg3: memref<512x128xbf16, #tpu.memory_space<vmem>>, %arg4: memref<128x128xbf16, #tpu.memory_space<vmem>>, %arg5: memref<128x128xbf16, #tpu.memory_space<vmem>>, %arg6: memref<5x128xf32, #tpu.memory_space<vmem>>, %arg7: memref<256x128xf32, #tpu.memory_space<vmem>>) attributes {dimension_semantics = [#tpu.dimension_semantics<parallel>], iteration_bounds = array<i64: 2>, scalar_prefetch = 0 : i64, scratch_operands = 0 : i64, tpu.core_type = #tpu.core_type<tc>, window_params = [{transform_indices = @transform_0, window_bounds = array<i64: 256, 512>}, {transform_indices = @transform_1, window_bounds = array<i64: 256, 128>}, {pipeline_mode = #tpu.pipeline_mode<synchronous>, transform_indices = @transform_2, window_bounds = array<i64: 512, 128>}, {pipeline_mode = #tpu.pipeline_mode<synchronous>, transform_indices = @transform_3, window_bounds = array<i64: 128, 128>}, {pipeline_mode = #tpu.pipeline_mode<synchronous>, transform_indices = @transform_4, window_bounds = array<i64: 128, 128>}, {pipeline_mode = #tpu.pipeline_mode<synchronous>, transform_indices = @transform_5, window_bounds = array<i64: 5, 128>}, {transform_indices = @transform_6, window_bounds = array<i64: 256, 128>}]} {
    %c0 = arith.constant 0 : index
    %c0_0 = arith.constant 0 : index
    %0 = vector.load %arg6[%c0, %c0_0] : memref<5x128xf32, #tpu.memory_space<vmem>>, vector<1x128xf32>
    %c1 = arith.constant 1 : index
    %c0_1 = arith.constant 0 : index
    %1 = vector.load %arg6[%c1, %c0_1] : memref<5x128xf32, #tpu.memory_space<vmem>>, vector<1x128xf32>
    %c2 = arith.constant 2 : index
    %c0_2 = arith.constant 0 : index
    %2 = vector.load %arg6[%c2, %c0_2] : memref<5x128xf32, #tpu.memory_space<vmem>>, vector<1x128xf32>
    %c3 = arith.constant 3 : index
    %c0_3 = arith.constant 0 : index
    %3 = vector.load %arg6[%c3, %c0_3] : memref<5x128xf32, #tpu.memory_space<vmem>>, vector<1x128xf32>
    %c4 = arith.constant 4 : index
    %c0_4 = arith.constant 0 : index
    %4 = vector.load %arg6[%c4, %c0_4] : memref<5x128xf32, #tpu.memory_space<vmem>>, vector<1x128xf32>
    %c0_5 = arith.constant 0 : index
    %c0_6 = arith.constant 0 : index
    %5 = vector.load %arg1[%c0_5, %c0_6] : memref<256x512xf32, #tpu.memory_space<vmem>>, vector<256x512xf32>
    %6 = arith.truncf %5 : vector<256x512xf32> to vector<256x512xbf16>
    %c0_7 = arith.constant 0 : index
    %c0_8 = arith.constant 0 : index
    %7 = vector.load %arg3[%c0_7, %c0_8] : memref<512x128xbf16, #tpu.memory_space<vmem>>, vector<512x128xbf16>
    %cst = arith.constant dense<0.000000e+00> : vector<256x128xf32>
    %8 = tpu.matmul %6, %7, %cst {dimension_numbers = #tpu.dot_dimension_numbers<[1], [0], [0], [1], [0, 0, 1, 1], [], []>} : vector<256x512xbf16>, vector<512x128xbf16>, vector<256x128xf32> -> vector<256x128xf32>
    %9 = vector.broadcast %0 : vector<1x128xf32> to vector<256x128xf32>
    %10 = arith.addf %8, %9 : vector<256x128xf32>
    %11 = arith.truncf %10 : vector<256x128xf32> to vector<256x128xbf16>
    %c0_9 = arith.constant 0 : index
    %c0_10 = arith.constant 0 : index
    %12 = vector.load %arg4[%c0_9, %c0_10] : memref<128x128xbf16, #tpu.memory_space<vmem>>, vector<128x128xbf16>
    %cst_11 = arith.constant dense<0.000000e+00> : vector<256x128xf32>
    %13 = tpu.matmul %11, %12, %cst_11 {dimension_numbers = #tpu.dot_dimension_numbers<[1], [0], [0], [1], [0, 0, 1, 1], [], []>} : vector<256x128xbf16>, vector<128x128xbf16>, vector<256x128xf32> -> vector<256x128xf32>
    %14 = vector.broadcast %4 : vector<1x128xf32> to vector<256x128xf32>
    %15 = arith.addf %13, %14 : vector<256x128xf32>
    %cst_12 = arith.constant 5.000000e-01 : f32
    %16 = vector.broadcast %cst_12 : f32 to vector<256x128xf32>
    %17 = arith.mulf %16, %15 : vector<256x128xf32>
    %cst_13 = arith.constant 0.707106769 : f32
    %18 = vector.broadcast %cst_13 : f32 to vector<256x128xf32>
    %19 = arith.mulf %15, %18 : vector<256x128xf32>
    %20 = math.erf %19 : vector<256x128xf32>
    %cst_14 = arith.constant 1.000000e+00 : f32
    %21 = vector.broadcast %cst_14 : f32 to vector<256x128xf32>
    %22 = arith.addf %21, %20 : vector<256x128xf32>
    %23 = arith.mulf %17, %22 : vector<256x128xf32>
    %24 = arith.truncf %23 : vector<256x128xf32> to vector<256x128xbf16>
    %c0_15 = arith.constant 0 : index
    %c0_16 = arith.constant 0 : index
    %25 = vector.load %arg5[%c0_15, %c0_16] : memref<128x128xbf16, #tpu.memory_space<vmem>>, vector<128x128xbf16>
    %cst_17 = arith.constant dense<0.000000e+00> : vector<256x128xf32>
    %26 = tpu.matmul %24, %25, %cst_17 {dimension_numbers = #tpu.dot_dimension_numbers<[1], [0], [0], [1], [0, 0, 1, 1], [], []>} : vector<256x128xbf16>, vector<128x128xbf16>, vector<256x128xf32> -> vector<256x128xf32>
    %27 = vector.broadcast %1 : vector<1x128xf32> to vector<256x128xf32>
    %28 = arith.addf %26, %27 : vector<256x128xf32>
    %29 = arith.addf %10, %28 : vector<256x128xf32>
    %c0_18 = arith.constant 0 : index
    %c0_19 = arith.constant 0 : index
    %30 = vector.load %arg2[%c0_18, %c0_19] : memref<256x128xf32, #tpu.memory_space<vmem>>, vector<256x128xf32>
    %31 = arith.addf %29, %30 : vector<256x128xf32>
    %cst_20 = arith.constant dense<0.000000e+00> : vector<256xf32>
    %32 = vector.multi_reduction <add>, %31, %cst_20 [1] : vector<256x128xf32> to vector<256xf32>
    %33 = vector.shape_cast %32 : vector<256xf32> to vector<256x1xf32>
    %cst_21 = arith.constant 7.812500e-03 : f32
    %34 = vector.broadcast %cst_21 : f32 to vector<256x1xf32>
    %35 = arith.mulf %33, %34 : vector<256x1xf32>
    %36 = arith.mulf %31, %31 : vector<256x128xf32>
    %cst_22 = arith.constant dense<0.000000e+00> : vector<256xf32>
    %37 = vector.multi_reduction <add>, %36, %cst_22 [1] : vector<256x128xf32> to vector<256xf32>
    %38 = vector.shape_cast %37 : vector<256xf32> to vector<256x1xf32>
    %cst_23 = arith.constant 7.812500e-03 : f32
    %39 = vector.broadcast %cst_23 : f32 to vector<256x1xf32>
    %40 = arith.mulf %38, %39 : vector<256x1xf32>
    %41 = arith.mulf %35, %35 : vector<256x1xf32>
    %42 = arith.subf %40, %41 : vector<256x1xf32>
    %cst_24 = arith.constant 0.000000e+00 : f32
    %43 = vector.broadcast %cst_24 : f32 to vector<256x1xf32>
    %44 = arith.maximumf %42, %43 : vector<256x1xf32>
    %cst_25 = arith.constant 9.99999996E-13 : f32
    %45 = vector.broadcast %cst_25 : f32 to vector<256x1xf32>
    %46 = arith.addf %44, %45 : vector<256x1xf32>
    %47 = math.rsqrt %46 : vector<256x1xf32>
    %48 = vector.broadcast %2 : vector<1x128xf32> to vector<256x128xf32>
    %49 = vector.broadcast %47 : vector<256x1xf32> to vector<256x128xf32>
    %50 = arith.mulf %48, %49 : vector<256x128xf32>
    %51 = arith.mulf %31, %50 : vector<256x128xf32>
    %52 = vector.broadcast %35 : vector<256x1xf32> to vector<256x128xf32>
    %53 = arith.mulf %52, %50 : vector<256x128xf32>
    %54 = vector.broadcast %3 : vector<1x128xf32> to vector<256x128xf32>
    %55 = arith.subf %54, %53 : vector<256x128xf32>
    %56 = arith.addf %51, %55 : vector<256x128xf32>
    %c0_26 = arith.constant 0 : index
    %c0_27 = arith.constant 0 : index
    %57 = vector.load %arg7[%c0_26, %c0_27] : memref<256x128xf32, #tpu.memory_space<vmem>>, vector<256x128xf32>
    tpu.vector_store %arg7[%c0_26, %c0_27], %56 {strides = array<i32>} : memref<256x128xf32, #tpu.memory_space<vmem>>, vector<256x128xf32>,
    return
  }
  func.func @transform_0(%arg0: i32) -> (i32, i32) {
    %c0_i32 = arith.constant 0 : i32
    %c0_i32_0 = arith.constant 0 : i32
    return %arg0, %c0_i32 : i32, i32
  }
  func.func @transform_1(%arg0: i32) -> (i32, i32) {
    %c0_i32 = arith.constant 0 : i32
    %c0_i32_0 = arith.constant 0 : i32
    return %arg0, %c0_i32 : i32, i32
  }
  func.func @transform_2(%arg0: i32) -> (i32, i32) {
    %c0_i32 = arith.constant 0 : i32
    %c0_i32_0 = arith.constant 0 : i32
    %c0_i32_1 = arith.constant 0 : i32
    return %c0_i32, %c0_i32_0 : i32, i32
  }
  func.func @transform_3(%arg0: i32) -> (i32, i32) {
    %c0_i32 = arith.constant 0 : i32
    %c0_i32_0 = arith.constant 0 : i32
    %c0_i32_1 = arith.constant 0 : i32
    return %c0_i32, %c0_i32_0 : i32, i32
  }
  func.func @transform_4(%arg0: i32) -> (i32, i32) {
    %c0_i32 = arith.constant 0 : i32
    %c0_i32_0 = arith.constant 0 : i32
    %c0_i32_1 = arith.constant 0 : i32
    return %c0_i32, %c0_i32_0 : i32, i32
  }
  func.func @transform_5(%arg0: i32) -> (i32, i32) {
    %c0_i32 = arith.constant 0 : i32
    %c0_i32_0 = arith.constant 0 : i32
    %c0_i32_1 = arith.constant 0 : i32
    return %c0_i32, %c0_i32_0 : i32, i32
  }
  func.func @transform_6(%arg0: i32) -> (i32, i32) {
    %c0_i32 = arith.constant 0 : i32
    %c0_i32_0 = arith.constant 0 : i32
    return %arg0, %c0_i32 : i32, i32
  }
}

</mosaic_0001>

<llo_original>
// kernel: bert_adapted_output.1
$region0: #{bert_adapted_output.1}
  #allocation0 [shape = 'u32[]', space=smem, size = 0x4, offset = 0x4, fixed_abs, tag = 'smem constant byte address 0x4 - core index']
  #allocation1 [shape = 'u32[144,128]{1,0:T(1,128)}', space=vmem, size = 0x12000, scoped, tag = 'internal scratch']
  %s0 = inlined_call_operand.hbm [shape: f32[512,512], index: 0, kind: input, shape index: {}]
  %s1 = inlined_call_operand.vmem [shape: f32[512,128], index: 1, kind: input, shape index: {}]
  %s2 = inlined_call_operand.vmem [shape: bf16[512,128], index: 2, kind: input, shape index: {}]
  %s3 = inlined_call_operand.vmem [shape: bf16[128,128], index: 3, kind: input, shape index: {}]
  %s4 = inlined_call_operand.vmem [shape: bf16[128,128], index: 4, kind: input, shape index: {}]
  %s5 = inlined_call_operand.vmem [shape: f32[5,128], index: 5, kind: input, shape index: {}]
  %s6 = inlined_call_operand.hbm [shape: f32[512,128], index: 6, kind: output, shape index: {}]
  %s7 = sld [smem:[#allocation0]]
  $region61: #{bert_adapted_output.1} parent=0
    _
  %s9 = ssub.s32 1, %s7
  %s10 = scalar_select 0, %s9, %s7
  $region1: #{bert_adapted_output.1} parent=0
    #allocation2 [shape = 'u8[1048576]{0}', space=vmem, size = 0x100000, scoped, tag = 'input window, operand 0']
    #allocation3 [shape = 's32[2]{0}', space=sflag, size = 0x8, scoped, tag = 'scoped memory for bert_adapted_output.1']
    #allocation4 [shape = 's32[2]{0}', space=sflag, size = 0x8, scoped, tag = 'scoped memory for bert_adapted_output.1']
    #allocation5 [shape = 'u8[262144]{0}', space=vmem, size = 0x40000, scoped, tag = 'output window, operand 0']
    %11 = vsyncpa [#allocation3], 0
    %s12 = scalar_lea.sflag [#allocation3], 1
    %13 = vsyncpa %s12, 0
    %14 = vsyncpa [#allocation4], 0
    %s15 = scalar_lea.sflag [#allocation4], 1
    %16 = vsyncpa %s15, 0
    loop: start=0, step=1, limit=4
    $region2: #{bert_adapted_output.1} parent=1 // loop_pre_header
      _
    $region3: #{bert_adapted_output.1} parent=1 // loop_header
      %s18 = sphi 0, %s22
      %p19 = scmp.ge.s32.totalorder %s18, 4
      %s28 = sphi 0, %s30
      %s31 = sphi 0, %s28
      %s32 = sphi 0, %s31
      %s48 = sphi 0, %s32
      %s54 = sphi 0, %s56
      %s57 = sphi 0, %s54
      %s58 = sphi 0, %s57
      %s74 = sphi 0, %s58
      %s78 = sphi 0, %s78
      %s80 = sphi 0, %s78
      %s81 = sphi 0, %s80
      %s95 = sphi 0, %s81
      %s99 = sphi 0, %s99
      %s101 = sphi 0, %s99
      %s102 = sphi 0, %s101
      %s116 = sphi 0, %s102
      %s120 = sphi 0, %s120
      %s122 = sphi 0, %s120
      %s123 = sphi 0, %s122
      %s137 = sphi 0, %s123
      %s141 = sphi 0, %s141
      %s143 = sphi 0, %s141
      %s144 = sphi 0, %s143
      %s158 = sphi 0, %s144
      %s164 = sphi 0, %s166
      %s167 = sphi 0, %s164
      %s168 = sphi 0, %s167
      %s184 = sphi 0, %s168
    $region4: #{bert_adapted_output.1} parent=1 // loop_header_branch
      %21 = sbr.rel (%p19) target = $region8
    $region5: #{bert_adapted_output.1} parent=1 // loop_body
      %s23 = ssub.s32 %s18, 1
      %s24 = ssub.s32 %s18, 2
      %s25 = sadd.s32 %s18, 1
      %s26 = ssub.s32 %s18, %s25
      %p27 = scmp.eq.s32.totalorder %s26, 0
      %s29 = sadd.s32 %s28, 1
      %s30 = scalar_select %p27, %s28, %s29
      %p33 = pneg %p27
      %p34 = scmp.eq.s32.totalorder %s18, 1
      %p35 = por %p33, %p34
      %p36 = scmp.ne.s32.totalorder %s28, %s31
      %p37 = scmp.eq.s32.totalorder %s18, 0
      %p38 = por %p36, %p37
      %p39 = scmp.ne.s32.totalorder %s28, %s31
      %p40 = scmp.eq.s32.totalorder %s23, 1
      %p41 = por %p39, %p40
      %p42 = scmp.ne.s32.totalorder %s31, %s32
      %p43 = scmp.eq.s32.totalorder %s23, 0
      %p44 = por %p42, %p43
      %p45 = scmp.ne.s32.totalorder %s31, %s32
      %p46 = scmp.eq.s32.totalorder %s24, 1
      %p47 = por %p45, %p46
      %p49 = scmp.ne.s32.totalorder %s32, %s48
      %p50 = scmp.eq.s32.totalorder %s24, 0
      %p51 = por %p49, %p50
      %s52 = ssub.s32 %s18, %s25
      %p53 = scmp.eq.s32.totalorder %s52, 0
      %s55 = sadd.s32 %s54, 1
      %s56 = scalar_select %p53, %s54, %s55
      %p59 = pneg %p53
      %p60 = scmp.eq.s32.totalorder %s18, 1
      %p61 = por %p59, %p60
      %p62 = scmp.ne.s32.totalorder %s54, %s57
      %p63 = scmp.eq.s32.totalorder %s18, 0
      %p64 = por %p62, %p63
      %p65 = scmp.ne.s32.totalorder %s54, %s57
      %p66 = scmp.eq.s32.totalorder %s23, 1
      %p67 = por %p65, %p66
      %p68 = scmp.ne.s32.totalorder %s57, %s58
      %p69 = scmp.eq.s32.totalorder %s23, 0
      %p70 = por %p68, %p69
      %p71 = scmp.ne.s32.totalorder %s57, %s58
      %p72 = scmp.eq.s32.totalorder %s24, 1
      %p73 = por %p71, %p72
      %p75 = scmp.ne.s32.totalorder %s58, %s74
      %p76 = scmp.eq.s32.totalorder %s24, 0
      %p77 = por %p75, %p76
      %s79 = sadd.s32 %s78, 1
      %p82 = scmp.eq.s32.totalorder %s18, 1
      %p83 = scmp.ne.s32.totalorder %s78, %s80
      %p84 = scmp.eq.s32.totalorder %s18, 0
      %p85 = por %p83, %p84
      %p86 = scmp.ne.s32.totalorder %s78, %s80
      %p87 = scmp.eq.s32.totalorder %s23, 1
      %p88 = por %p86, %p87
      %p89 = scmp.ne.s32.totalorder %s80, %s81
      %p90 = scmp.eq.s32.totalorder %s23, 0
      %p91 = por %p89, %p90
      %p92 = scmp.ne.s32.totalorder %s80, %s81
      %p93 = scmp.eq.s32.totalorder %s24, 1
      %p94 = por %p92, %p93
      %p96 = scmp.ne.s32.totalorder %s81, %s95
      %p97 = scmp.eq.s32.totalorder %s24, 0
      %p98 = por %p96, %p97
      %s100 = sadd.s32 %s99, 1
      %p103 = scmp.eq.s32.totalorder %s18, 1
      %p104 = scmp.ne.s32.totalorder %s99, %s101
      %p105 = scmp.eq.s32.totalorder %s18, 0
      %p106 = por %p104, %p105
      %p107 = scmp.ne.s32.totalorder %s99, %s101
      %p108 = scmp.eq.s32.totalorder %s23, 1
      %p109 = por %p107, %p108
      %p110 = scmp.ne.s32.totalorder %s101, %s102
      %p111 = scmp.eq.s32.totalorder %s23, 0
      %p112 = por %p110, %p111
      %p113 = scmp.ne.s32.totalorder %s101, %s102
      %p114 = scmp.eq.s32.totalorder %s24, 1
      %p115 = por %p113, %p114
      %p117 = scmp.ne.s32.totalorder %s102, %s116
      %p118 = scmp.eq.s32.totalorder %s24, 0
      %p119 = por %p117, %p118
      %s121 = sadd.s32 %s120, 1
      %p124 = scmp.eq.s32.totalorder %s18, 1
      %p125 = scmp.ne.s32.totalorder %s120, %s122
      %p126 = scmp.eq.s32.totalorder %s18, 0
      %p127 = por %p125, %p126
      %p128 = scmp.ne.s32.totalorder %s120, %s122
      %p129 = scmp.eq.s32.totalorder %s23, 1
      %p130 = por %p128, %p129
      %p131 = scmp.ne.s32.totalorder %s122, %s123
      %p132 = scmp.eq.s32.totalorder %s23, 0
      %p133 = por %p131, %p132
      %p134 = scmp.ne.s32.totalorder %s122, %s123
      %p135 = scmp.eq.s32.totalorder %s24, 1
      %p136 = por %p134, %p135
      %p138 = scmp.ne.s32.totalorder %s123, %s137
      %p139 = scmp.eq.s32.totalorder %s24, 0
      %p140 = por %p138, %p139
      %s142 = sadd.s32 %s141, 1
      %p145 = scmp.eq.s32.totalorder %s18, 1
      %p146 = scmp.ne.s32.totalorder %s141, %s143
      %p147 = scmp.eq.s32.totalorder %s18, 0
      %p148 = por %p146, %p147
      %p149 = scmp.ne.s32.totalorder %s141, %s143
      %p150 = scmp.eq.s32.totalorder %s23, 1
      %p151 = por %p149, %p150
      %p152 = scmp.ne.s32.totalorder %s143, %s144
      %p153 = scmp.eq.s32.totalorder %s23, 0
      %p154 = por %p152, %p153
      %p155 = scmp.ne.s32.totalorder %s143, %s144
      %p156 = scmp.eq.s32.totalorder %s24, 1
      %p157 = por %p155, %p156
      %p159 = scmp.ne.s32.totalorder %s144, %s158
      %p160 = scmp.eq.s32.totalorder %s24, 0
      %p161 = por %p159, %p160
      %s162 = ssub.s32 %s18, %s25
      %p163 = scmp.eq.s32.totalorder %s162, 0
      %s165 = sadd.s32 %s164, 1
      %s166 = scalar_select %p163, %s164, %s165
      %p169 = pneg %p163
      %p170 = scmp.eq.s32.totalorder %s18, 1
      %p171 = por %p169, %p170
      %p172 = scmp.ne.s32.totalorder %s164, %s167
      %p173 = scmp.eq.s32.totalorder %s18, 0
      %p174 = por %p172, %p173
      %p175 = scmp.ne.s32.totalorder %s164, %s167
      %p176 = scmp.eq.s32.totalorder %s23, 1
      %p177 = por %p175, %p176
      %p178 = scmp.ne.s32.totalorder %s167, %s168
      %p179 = scmp.eq.s32.totalorder %s23, 0
      %p180 = por %p178, %p179
      %p181 = scmp.ne.s32.totalorder %s167, %s168
      %p182 = scmp.eq.s32.totalorder %s24, 1
      %p183 = por %p181, %p182
      %p185 = scmp.ne.s32.totalorder %s168, %s184
      %p186 = scmp.eq.s32.totalorder %s24, 0
      %p187 = por %p185, %p186
      %p188 = scmp.le.s32.totalorder 1, %s18
      %p189 = scmp.lt.s32.totalorder %s18, 3
      %p190 = pnand %p188, %p189
      %p191 = pneg %p190
      // Predicated region
      $region9: #{bert_adapted_output.1} parent=5 // pred_check
        _
      $region10: #{bert_adapted_output.1} parent=5 // pred_check_branch
        %193 = sbr.rel (%p190) target = $region12
      $region11: #{bert_adapted_output.1} parent=5 // pred_region
        %s194 = ssub.s32 %s18, 1
        // Predicated region
        $region13: #{bert_adapted_output.1} parent=11 // pred_check
          %p195 = pneg %p91
        $region14: #{bert_adapted_output.1} parent=11 // pred_check_branch
          %197 = sbr.rel (%p195) target = $region16
        $region15: #{bert_adapted_output.1} parent=11 // pred_region
          _
        $region16: #{bert_adapted_output.1} parent=11 // pred_fallthru
          _
        // Predicated region
        $region17: #{bert_adapted_output.1} parent=11 // pred_check
          %p198 = pneg %p112
        $region18: #{bert_adapted_output.1} parent=11 // pred_check_branch
          %200 = sbr.rel (%p198) target = $region20
        $region19: #{bert_adapted_output.1} parent=11 // pred_region
          _
        $region20: #{bert_adapted_output.1} parent=11 // pred_fallthru
          _
        // Predicated region
        $region21: #{bert_adapted_output.1} parent=11 // pred_check
          %p201 = pneg %p133
        $region22: #{bert_adapted_output.1} parent=11 // pred_check_branch
          %203 = sbr.rel (%p201) target = $region24
        $region23: #{bert_adapted_output.1} parent=11 // pred_region
          _
        $region24: #{bert_adapted_output.1} parent=11 // pred_fallthru
          _
        // Predicated region
        $region25: #{bert_adapted_output.1} parent=11 // pred_check
          %p204 = pneg %p154
        $region26: #{bert_adapted_output.1} parent=11 // pred_check_branch
          %206 = sbr.rel (%p204) target = $region28
        $region27: #{bert_adapted_output.1} parent=11 // pred_region
          _
        $region28: #{bert_adapted_output.1} parent=11 // pred_fallthru
          _
      $region12: #{bert_adapted_output.1} parent=5 // pred_fallthru
        _
      %p207 = scmp.lt.s32.totalorder %s18, 2
      // Predicated region
      $region29: #{bert_adapted_output.1} parent=5 // pred_check
        %p208 = pneg %p207
      $region30: #{bert_adapted_output.1} parent=5 // pred_check_branch
        %210 = sbr.rel (%p208) target = $region32
      $region31: #{bert_adapted_output.1} parent=5 // pred_region
        // Predicated region
        $region33: #{bert_adapted_output.1} parent=31 // pred_check
          %p211 = pneg %p38
        $region34: #{bert_adapted_output.1} parent=31 // pred_check_branch
          %213 = sbr.rel (%p211) target = $region36
        $region35: #{bert_adapted_output.1} parent=31 // pred_region
          %s214 = sand.u32 %s28, 1
          %s215 = scalar_lea.sflag [#allocation3], %s214
          %s216 = sand.u32 %s28, 1
          %s217 = smul.addr %s216, 1024
          %s218 = scalar_lea.vmem [#allocation2], %s217
          %s219 = smul.u32 32, %s18
          %s221 = ssub.s32 16384, 16384
          %222 = vsyncadd %s215, %s221
          %s223 = smul.addr %s219, 4
          %s224 = smul.addr %s223, 128
          %s225 = scalar_lea.hbm %s0, %s224
          %s226 = sshll.u32 %s218, 4
          %s227 = int_to_ptr.vmem [resolvable:$true] %s226
          %232 = dma.hbm_to_vmem [thread:$0]  %s225, 16384, %s227, %s215, 512, 512, 32
        $region36: #{bert_adapted_output.1} parent=31 // pred_fallthru
          _
        // Predicated region
        $region37: #{bert_adapted_output.1} parent=31 // pred_check
          %p233 = pneg %p64
        $region38: #{bert_adapted_output.1} parent=31 // pred_check_branch
          %235 = sbr.rel (%p233) target = $region40
        $region39: #{bert_adapted_output.1} parent=31 // pred_region
          %s236 = smul.u32 32, %s18
          %p237 = scmp.lt.s32.totalorder %s236, 63
          %s238 = scalar_select %p237, %s236, 63
          %s239 = smul.addr %s238, 8
          %s240 = scalar_lea.vmem %s1, %s239
          %s241 = smul.u32 32, %s18
        $region40: #{bert_adapted_output.1} parent=31 // pred_fallthru
          _
      $region32: #{bert_adapted_output.1} parent=5 // pred_fallthru
        _
      %p242 = scmp.le.s32.totalorder 1, %s18
      %p243 = scmp.lt.s32.totalorder %s18, 3
      %p244 = pnand %p242, %p243
      %p245 = pneg %p244
      // Predicated region
      $region41: #{bert_adapted_output.1} parent=5 // pred_check
        _
      $region42: #{bert_adapted_output.1} parent=5 // pred_check_branch
        %247 = sbr.rel (%p244) target = $region44
      $region43: #{bert_adapted_output.1} parent=5 // pred_region
        %s248 = ssub.s32 %s18, 1
        %s249 = sand.u32 %s31, 1
        %s250 = scalar_lea.sflag [#allocation3], %s249
        %s251 = sand.u32 %s31, 1
        %s252 = smul.addr %s251, 1024
        %s253 = scalar_lea.vmem [#allocation2], %s252
        // Predicated region
        $region45: #{bert_adapted_output.1} parent=43 // pred_check
          %p254 = pneg %p44
        $region46: #{bert_adapted_output.1} parent=43 // pred_check_branch
          %256 = sbr.rel (%p254) target = $region48
        $region47: #{bert_adapted_output.1} parent=43 // pred_region
          %257 = dma.done %s250, 16384
        $region48: #{bert_adapted_output.1} parent=43 // pred_fallthru
          _
        %s258 = sand.u32 %s31, 1
        %s259 = scalar_lea.sflag [#allocation3], %s258
        %s260 = sand.u32 %s31, 1
        %s261 = smul.addr %s260, 1024
        %s262 = scalar_lea.vmem [#allocation2], %s261
        %p263 = pneg %p44
        %p264 = pneg %p41
        %s265 = smul.u32 32, %s23
        %p266 = scmp.lt.s32.totalorder %s265, 63
        %s267 = scalar_select %p266, %s265, 63
        %s268 = smul.addr %s267, 8
        %s269 = scalar_lea.vmem %s1, %s268
        %p270 = pneg %p70
        %p271 = pneg %p67
        %p272 = pneg %p91
        %p273 = pneg %p88
        %p274 = pneg %p112
        %p275 = pneg %p109
        %p276 = pneg %p133
        %p277 = pneg %p130
        %p278 = pneg %p154
        %p279 = pneg %p151
        %p280 = pneg %p180
        %p281 = pneg %p177
        %s282 = sand.u32 %s167, 1
        %s283 = scalar_lea.sflag [#allocation4], %s282
        %s284 = sand.u32 %s167, 1
        %s285 = smul.addr %s284, 256
        %s286 = scalar_lea.vmem [#allocation5], %s285
        %s287 = smul.u32 32, %s23
        %s288 = smul.u32 32, %s23
        %p289 = scmp.lt.s32.totalorder %s288, 63
        %s290 = scalar_select %p289, %s288, 63
        %s291 = smul.addr %s290, 8
        %s292 = scalar_lea.vmem %s1, %s291
        %s293 = smul.u32 32, %s23
        %s294 = smul.u32 32, %s23
        %v296 = vld [vmem:[%s5] sm:$0x1]
        %v297 = vld [vmem:[%s5 + $0x1] sm:$0x1]
        %v298 = vld [vmem:[%s5 + $0x2] sm:$0x1]
        %v299 = vld [vmem:[%s5 + $0x3] sm:$0x1]
        %v300 = vld [vmem:[%s5 + $0x4] sm:$0x1]
        %v301 = vld [vmem:[%s253] sm:$0xff]
        %v302 = vld [vmem:[%s253 + $0x8] sm:$0xff]
        %v303 = vld [vmem:[%s253 + $0x10] sm:$0xff]
        %v304 = vld [vmem:[%s253 + $0x18] sm:$0xff]
        %v305 = vld [vmem:[%s253 + $0x20] sm:$0xff]
        %v306 = vld [vmem:[%s253 + $0x28] sm:$0xff]
        %v307 = vld [vmem:[%s253 + $0x30] sm:$0xff]
        %v308 = vld [vmem:[%s253 + $0x38] sm:$0xff]
        %v309 = vld [vmem:[%s253 + $0x40] sm:$0xff]
        %v310 = vld [vmem:[%s253 + $0x48] sm:$0xff]
        %v311 = vld [vmem:[%s253 + $0x50] sm:$0xff]
        %v312 = vld [vmem:[%s253 + $0x58] sm:$0xff]
        %v313 = vld [vmem:[%s253 + $0x60] sm:$0xff]
        %v314 = vld [vmem:[%s253 + $0x68] sm:$0xff]
        %v315 = vld [vmem:[%s253 + $0x70] sm:$0xff]
        %v316 = vld [vmem:[%s253 + $0x78] sm:$0xff]
        %v317 = vld [vmem:[%s253 + $0x80] sm:$0xff]
        %v318 = vld [vmem:[%s253 + $0x88] sm:$0xff]
        %v319 = vld [vmem:[%s253 + $0x90] sm:$0xff]
        %v320 = vld [vmem:[%s253 + $0x98] sm:$0xff]
        %v321 = vld [vmem:[%s253 + $0xa0] sm:$0xff]
        %v322 = vld [vmem:[%s253 + $0xa8] sm:$0xff]
        %v323 = vld [vmem:[%s253 + $0xb0] sm:$0xff]
        %v324 = vld [vmem:[%s253 + $0xb8] sm:$0xff]
        %v325 = vld [vmem:[%s253 + $0xc0] sm:$0xff]
        %v326 = vld [vmem:[%s253 + $0xc8] sm:$0xff]
        %v327 = vld [vmem:[%s253 + $0xd0] sm:$0xff]
        %v328 = vld [vmem:[%s253 + $0xd8] sm:$0xff]
        %v329 = vld [vmem:[%s253 + $0xe0] sm:$0xff]
        %v330 = vld [vmem:[%s253 + $0xe8] sm:$0xff]
        %v331 = vld [vmem:[%s253 + $0xf0] sm:$0xff]
        %v332 = vld [vmem:[%s253 + $0xf8] sm:$0xff]
        %v333 = vld [vmem:[%s253 + $0x100] sm:$0xff]
        %v334 = vld [vmem:[%s253 + $0x108] sm:$0xff]
        %v335 = vld [vmem:[%s253 + $0x110] sm:$0xff]
        %v336 = vld [vmem:[%s253 + $0x118] sm:$0xff]
        %v337 = vld [vmem:[%s253 + $0x120] sm:$0xff]
        %v338 = vld [vmem:[%s253 + $0x128] sm:$0xff]
        %v339 = vld [vmem:[%s253 + $0x130] sm:$0xff]
        %v340 = vld [vmem:[%s253 + $0x138] sm:$0xff]
        %v341 = vld [vmem:[%s253 + $0x140] sm:$0xff]
        %v342 = vld [vmem:[%s253 + $0x148] sm:$0xff]
        %v343 = vld [vmem:[%s253 + $0x150] sm:$0xff]
        %v344 = vld [vmem:[%s253 + $0x158] sm:$0xff]
        %v345 = vld [vmem:[%s253 + $0x160] sm:$0xff]
        %v346 = vld [vmem:[%s253 + $0x168] sm:$0xff]
        %v347 = vld [vmem:[%s253 + $0x170] sm:$0xff]
        %v348 = vld [vmem:[%s253 + $0x178] sm:$0xff]
        %v349 = vld [vmem:[%s253 + $0x180] sm:$0xff]
        %v350 = vld [vmem:[%s253 + $0x188] sm:$0xff]
        %v351 = vld [vmem:[%s253 + $0x190] sm:$0xff]
        %v352 = vld [vmem:[%s253 + $0x198] sm:$0xff]
        %v353 = vld [vmem:[%s253 + $0x1a0] sm:$0xff]
        %v354 = vld [vmem:[%s253 + $0x1a8] sm:$0xff]
        %v355 = vld [vmem:[%s253 + $0x1b0] sm:$0xff]
        %v356 = vld [vmem:[%s253 + $0x1b8] sm:$0xff]
        %v357 = vld [vmem:[%s253 + $0x1c0] sm:$0xff]
        %v358 = vld [vmem:[%s253 + $0x1c8] sm:$0xff]
        %v359 = vld [vmem:[%s253 + $0x1d0] sm:$0xff]
        %v360 = vld [vmem:[%s253 + $0x1d8] sm:$0xff]
        %v361 = vld [vmem:[%s253 + $0x1e0] sm:$0xff]
        %v362 = vld [vmem:[%s253 + $0x1e8] sm:$0xff]
        %v363 = vld [vmem:[%s253 + $0x1f0] sm:$0xff]
        %v364 = vld [vmem:[%s253 + $0x1f8] sm:$0xff]
        %v365 = vld [vmem:[%s253 + $0x200] sm:$0xff]
        %v366 = vld [vmem:[%s253 + $0x208] sm:$0xff]
        %v367 = vld [vmem:[%s253 + $0x210] sm:$0xff]
        %v368 = vld [vmem:[%s253 + $0x218] sm:$0xff]
        %v369 = vld [vmem:[%s253 + $0x220] sm:$0xff]
        %v370 = vld [vmem:[%s253 + $0x228] sm:$0xff]
        %v371 = vld [vmem:[%s253 + $0x230] sm:$0xff]
        %v372 = vld [vmem:[%s253 + $0x238] sm:$0xff]
        %v373 = vld [vmem:[%s253 + $0x240] sm:$0xff]
        %v374 = vld [vmem:[%s253 + $0x248] sm:$0xff]
        %v375 = vld [vmem:[%s253 + $0x250] sm:$0xff]
        %v376 = vld [vmem:[%s253 + $0x258] sm:$0xff]
        %v377 = vld [vmem:[%s253 + $0x260] sm:$0xff]
        %v378 = vld [vmem:[%s253 + $0x268] sm:$0xff]
        %v379 = vld [vmem:[%s253 + $0x270] sm:$0xff]
        %v380 = vld [vmem:[%s253 + $0x278] sm:$0xff]
        %v381 = vld [vmem:[%s253 + $0x280] sm:$0xff]
        %v382 = vld [vmem:[%s253 + $0x288] sm:$0xff]
        %v383 = vld [vmem:[%s253 + $0x290] sm:$0xff]
        %v384 = vld [vmem:[%s253 + $0x298] sm:$0xff]
        %v385 = vld [vmem:[%s253 + $0x2a0] sm:$0xff]
        %v386 = vld [vmem:[%s253 + $0x2a8] sm:$0xff]
        %v387 = vld [vmem:[%s253 + $0x2b0] sm:$0xff]
        %v388 = vld [vmem:[%s253 + $0x2b8] sm:$0xff]
        %v389 = vld [vmem:[%s253 + $0x2c0] sm:$0xff]
        %v390 = vld [vmem:[%s253 + $0x2c8] sm:$0xff]
        %v391 = vld [vmem:[%s253 + $0x2d0] sm:$0xff]
        %v392 = vld [vmem:[%s253 + $0x2d8] sm:$0xff]
        %v393 = vld [vmem:[%s253 + $0x2e0] sm:$0xff]
        %v394 = vld [vmem:[%s253 + $0x2e8] sm:$0xff]
        %v395 = vld [vmem:[%s253 + $0x2f0] sm:$0xff]
        %v396 = vld [vmem:[%s253 + $0x2f8] sm:$0xff]
        %v397 = vld [vmem:[%s253 + $0x300] sm:$0xff]
        %v398 = vld [vmem:[%s253 + $0x308] sm:$0xff]
        %v399 = vld [vmem:[%s253 + $0x310] sm:$0xff]
        %v400 = vld [vmem:[%s253 + $0x318] sm:$0xff]
        %v401 = vld [vmem:[%s253 + $0x320] sm:$0xff]
        %v402 = vld [vmem:[%s253 + $0x328] sm:$0xff]
        %v403 = vld [vmem:[%s253 + $0x330] sm:$0xff]
        %v404 = vld [vmem:[%s253 + $0x338] sm:$0xff]
        %v405 = vld [vmem:[%s253 + $0x340] sm:$0xff]
        %v406 = vld [vmem:[%s253 + $0x348] sm:$0xff]
        %v407 = vld [vmem:[%s253 + $0x350] sm:$0xff]
        %v408 = vld [vmem:[%s253 + $0x358] sm:$0xff]
        %v409 = vld [vmem:[%s253 + $0x360] sm:$0xff]
        %v410 = vld [vmem:[%s253 + $0x368] sm:$0xff]
        %v411 = vld [vmem:[%s253 + $0x370] sm:$0xff]
        %v412 = vld [vmem:[%s253 + $0x378] sm:$0xff]
        %v413 = vld [vmem:[%s253 + $0x380] sm:$0xff]
        %v414 = vld [vmem:[%s253 + $0x388] sm:$0xff]
        %v415 = vld [vmem:[%s253 + $0x390] sm:$0xff]
        %v416 = vld [vmem:[%s253 + $0x398] sm:$0xff]
        %v417 = vld [vmem:[%s253 + $0x3a0] sm:$0xff]
        %v418 = vld [vmem:[%s253 + $0x3a8] sm:$0xff]
        %v419 = vld [vmem:[%s253 + $0x3b0] sm:$0xff]
        %v420 = vld [vmem:[%s253 + $0x3b8] sm:$0xff]
        %v421 = vld [vmem:[%s253 + $0x3c0] sm:$0xff]
        %v422 = vld [vmem:[%s253 + $0x3c8] sm:$0xff]
        %v423 = vld [vmem:[%s253 + $0x3d0] sm:$0xff]
        %v424 = vld [vmem:[%s253 + $0x3d8] sm:$0xff]
        %v425 = vld [vmem:[%s253 + $0x3e0] sm:$0xff]
        %v426 = vld [vmem:[%s253 + $0x3e8] sm:$0xff]
        %v427 = vld [vmem:[%s253 + $0x3f0] sm:$0xff]
        %v428 = vld [vmem:[%s253 + $0x3f8] sm:$0xff]
        %v429 = vpack.c.bf16 %v305, %v301
        %v430 = vpack.c.bf16 %v306, %v302
        %v431 = vpack.c.bf16 %v307, %v303
        %v432 = vpack.c.bf16 %v308, %v304
        %v433 = vpack.c.bf16 %v313, %v309
        %v434 = vpack.c.bf16 %v314, %v310
        %v435 = vpack.c.bf16 %v315, %v311
        %v436 = vpack.c.bf16 %v316, %v312
        %v437 = vpack.c.bf16 %v321, %v317
        %v438 = vpack.c.bf16 %v322, %v318
        %v439 = vpack.c.bf16 %v323, %v319
        %v440 = vpack.c.bf16 %v324, %v320
        %v441 = vpack.c.bf16 %v329, %v325
        %v442 = vpack.c.bf16 %v330, %v326
        %v443 = vpack.c.bf16 %v331, %v327
        %v444 = vpack.c.bf16 %v332, %v328
        %v445 = vpack.c.bf16 %v337, %v333
        %v446 = vpack.c.bf16 %v338, %v334
        %v447 = vpack.c.bf16 %v339, %v335
        %v448 = vpack.c.bf16 %v340, %v336
        %v449 = vpack.c.bf16 %v345, %v341
        %v450 = vpack.c.bf16 %v346, %v342
        %v451 = vpack.c.bf16 %v347, %v343
        %v452 = vpack.c.bf16 %v348, %v344
        %v453 = vpack.c.bf16 %v353, %v349
        %v454 = vpack.c.bf16 %v354, %v350
        %v455 = vpack.c.bf16 %v355, %v351
        %v456 = vpack.c.bf16 %v356, %v352
        %v457 = vpack.c.bf16 %v361, %v357
        %v458 = vpack.c.bf16 %v362, %v358
        %v459 = vpack.c.bf16 %v363, %v359
        %v460 = vpack.c.bf16 %v364, %v360
        %v461 = vpack.c.bf16 %v369, %v365
        %v462 = vpack.c.bf16 %v370, %v366
        %v463 = vpack.c.bf16 %v371, %v367
        %v464 = vpack.c.bf16 %v372, %v368
        %v465 = vpack.c.bf16 %v377, %v373
        %v466 = vpack.c.bf16 %v378, %v374
        %v467 = vpack.c.bf16 %v379, %v375
        %v468 = vpack.c.bf16 %v380, %v376
        %v469 = vpack.c.bf16 %v385, %v381
        %v470 = vpack.c.bf16 %v386, %v382
        %v471 = vpack.c.bf16 %v387, %v383
        %v472 = vpack.c.bf16 %v388, %v384
        %v473 = vpack.c.bf16 %v393, %v389
        %v474 = vpack.c.bf16 %v394, %v390
        %v475 = vpack.c.bf16 %v395, %v391
        %v476 = vpack.c.bf16 %v396, %v392
        %v477 = vpack.c.bf16 %v401, %v397
        %v478 = vpack.c.bf16 %v402, %v398
        %v479 = vpack.c.bf16 %v403, %v399
        %v480 = vpack.c.bf16 %v404, %v400
        %v481 = vpack.c.bf16 %v409, %v405
        %v482 = vpack.c.bf16 %v410, %v406
        %v483 = vpack.c.bf16 %v411, %v407
        %v484 = vpack.c.bf16 %v412, %v408
        %v485 = vpack.c.bf16 %v417, %v413
        %v486 = vpack.c.bf16 %v418, %v414
        %v487 = vpack.c.bf16 %v419, %v415
        %v488 = vpack.c.bf16 %v420, %v416
        %v489 = vpack.c.bf16 %v425, %v421
        %v490 = vpack.c.bf16 %v426, %v422
        %v491 = vpack.c.bf16 %v427, %v423
        %v492 = vpack.c.bf16 %v428, %v424
        %v493 = vld [vmem:[%s2] sm:$0xf]
        %v494 = vld [vmem:[%s2 + $0x4] sm:$0xf]
        %v495 = vld [vmem:[%s2 + $0x8] sm:$0xf]
        %v496 = vld [vmem:[%s2 + $0xc] sm:$0xf]
        %v497 = vld [vmem:[%s2 + $0x10] sm:$0xf]
        %v498 = vld [vmem:[%s2 + $0x14] sm:$0xf]
        %v499 = vld [vmem:[%s2 + $0x18] sm:$0xf]
        %v500 = vld [vmem:[%s2 + $0x1c] sm:$0xf]
        %v501 = vld [vmem:[%s2 + $0x20] sm:$0xf]
        %v502 = vld [vmem:[%s2 + $0x24] sm:$0xf]
        %v503 = vld [vmem:[%s2 + $0x28] sm:$0xf]
        %v504 = vld [vmem:[%s2 + $0x2c] sm:$0xf]
        %v505 = vld [vmem:[%s2 + $0x30] sm:$0xf]
        %v506 = vld [vmem:[%s2 + $0x34] sm:$0xf]
        %v507 = vld [vmem:[%s2 + $0x38] sm:$0xf]
        %v508 = vld [vmem:[%s2 + $0x3c] sm:$0xf]
        %v509 = vld [vmem:[%s2 + $0x40] sm:$0xf]
        %v510 = vld [vmem:[%s2 + $0x44] sm:$0xf]
        %v511 = vld [vmem:[%s2 + $0x48] sm:$0xf]
        %v512 = vld [vmem:[%s2 + $0x4c] sm:$0xf]
        %v513 = vld [vmem:[%s2 + $0x50] sm:$0xf]
        %v514 = vld [vmem:[%s2 + $0x54] sm:$0xf]
        %v515 = vld [vmem:[%s2 + $0x58] sm:$0xf]
        %v516 = vld [vmem:[%s2 + $0x5c] sm:$0xf]
        %v517 = vld [vmem:[%s2 + $0x60] sm:$0xf]
        %v518 = vld [vmem:[%s2 + $0x64] sm:$0xf]
        %v519 = vld [vmem:[%s2 + $0x68] sm:$0xf]
        %v520 = vld [vmem:[%s2 + $0x6c] sm:$0xf]
        %v521 = vld [vmem:[%s2 + $0x70] sm:$0xf]
        %v522 = vld [vmem:[%s2 + $0x74] sm:$0xf]
        %v523 = vld [vmem:[%s2 + $0x78] sm:$0xf]
        %v524 = vld [vmem:[%s2 + $0x7c] sm:$0xf]
        %v525 = vld [vmem:[%s2 + $0x80] sm:$0xf]
        %v526 = vld [vmem:[%s2 + $0x84] sm:$0xf]
        %v527 = vld [vmem:[%s2 + $0x88] sm:$0xf]
        %v528 = vld [vmem:[%s2 + $0x8c] sm:$0xf]
        %v529 = vld [vmem:[%s2 + $0x90] sm:$0xf]
        %v530 = vld [vmem:[%s2 + $0x94] sm:$0xf]
        %v531 = vld [vmem:[%s2 + $0x98] sm:$0xf]
        %v532 = vld [vmem:[%s2 + $0x9c] sm:$0xf]
        %v533 = vld [vmem:[%s2 + $0xa0] sm:$0xf]
        %v534 = vld [vmem:[%s2 + $0xa4] sm:$0xf]
        %v535 = vld [vmem:[%s2 + $0xa8] sm:$0xf]
        %v536 = vld [vmem:[%s2 + $0xac] sm:$0xf]
        %v537 = vld [vmem:[%s2 + $0xb0] sm:$0xf]
        %v538 = vld [vmem:[%s2 + $0xb4] sm:$0xf]
        %v539 = vld [vmem:[%s2 + $0xb8] sm:$0xf]
        %v540 = vld [vmem:[%s2 + $0xbc] sm:$0xf]
        %v541 = vld [vmem:[%s2 + $0xc0] sm:$0xf]
        %v542 = vld [vmem:[%s2 + $0xc4] sm:$0xf]
        %v543 = vld [vmem:[%s2 + $0xc8] sm:$0xf]
        %v544 = vld [vmem:[%s2 + $0xcc] sm:$0xf]
        %v545 = vld [vmem:[%s2 + $0xd0] sm:$0xf]
        %v546 = vld [vmem:[%s2 + $0xd4] sm:$0xf]
        %v547 = vld [vmem:[%s2 + $0xd8] sm:$0xf]
        %v548 = vld [vmem:[%s2 + $0xdc] sm:$0xf]
        %v549 = vld [vmem:[%s2 + $0xe0] sm:$0xf]
        %v550 = vld [vmem:[%s2 + $0xe4] sm:$0xf]
        %v551 = vld [vmem:[%s2 + $0xe8] sm:$0xf]
        %v552 = vld [vmem:[%s2 + $0xec] sm:$0xf]
        %v553 = vld [vmem:[%s2 + $0xf0] sm:$0xf]
        %v554 = vld [vmem:[%s2 + $0xf4] sm:$0xf]
        %v555 = vld [vmem:[%s2 + $0xf8] sm:$0xf]
        %v556 = vld [vmem:[%s2 + $0xfc] sm:$0xf]
        %v557 = vlaneseq
        %v558 = vshrl.u32 %v557, 7
        %v559 = vsub.s32 0, %v558
        %v560 = vrot.slane %v296, %v559
        %v625 = vunpack.c.l.b16 %v493
        %v626 = vunpack.c.l.b16 %v494
        %v627 = vunpack.c.l.b16 %v495
        %v628 = vunpack.c.l.b16 %v496
        %v629 = vunpack.c.l.b16 %v497
        %v630 = vunpack.c.l.b16 %v498
        %v631 = vunpack.c.l.b16 %v499
        %v632 = vunpack.c.l.b16 %v500
        %v633 = vunpack.c.l.b16 %v501
        %v634 = vunpack.c.l.b16 %v502
        %v635 = vunpack.c.l.b16 %v503
        %v636 = vunpack.c.l.b16 %v504
        %v637 = vunpack.c.l.b16 %v505
        %v638 = vunpack.c.l.b16 %v506
        %v639 = vunpack.c.l.b16 %v507
        %v640 = vunpack.c.l.b16 %v508
        %v641 = vunpack.c.l.b16 %v509
        %v642 = vunpack.c.l.b16 %v510
        %v643 = vunpack.c.l.b16 %v511
        %v644 = vunpack.c.l.b16 %v512
        %v645 = vunpack.c.l.b16 %v513
        %v646 = vunpack.c.l.b16 %v514
        %v647 = vunpack.c.l.b16 %v515
        %v648 = vunpack.c.l.b16 %v516
        %v649 = vunpack.c.l.b16 %v517
        %v650 = vunpack.c.l.b16 %v518
        %v651 = vunpack.c.l.b16 %v519
        %v652 = vunpack.c.l.b16 %v520
        %v653 = vunpack.c.l.b16 %v521
        %v654 = vunpack.c.l.b16 %v522
        %v655 = vunpack.c.l.b16 %v523
        %v656 = vunpack.c.l.b16 %v524
        %v657 = vunpack.c.l.b16 %v525
        %v658 = vunpack.c.l.b16 %v526
        %v659 = vunpack.c.l.b16 %v527
        %v660 = vunpack.c.l.b16 %v528
        %v661 = vunpack.c.l.b16 %v529
        %v662 = vunpack.c.l.b16 %v530
        %v663 = vunpack.c.l.b16 %v531
        %v664 = vunpack.c.l.b16 %v532
        %v665 = vunpack.c.l.b16 %v533
        %v666 = vunpack.c.l.b16 %v534
        %v667 = vunpack.c.l.b16 %v535
        %v668 = vunpack.c.l.b16 %v536
        %v669 = vunpack.c.l.b16 %v537
        %v670 = vunpack.c.l.b16 %v538
        %v671 = vunpack.c.l.b16 %v539
        %v672 = vunpack.c.l.b16 %v540
        %v673 = vunpack.c.l.b16 %v541
        %v674 = vunpack.c.l.b16 %v542
        %v675 = vunpack.c.l.b16 %v543
        %v676 = vunpack.c.l.b16 %v544
        %v677 = vunpack.c.l.b16 %v545
        %v678 = vunpack.c.l.b16 %v546
        %v679 = vunpack.c.l.b16 %v547
        %v680 = vunpack.c.l.b16 %v548
        %v681 = vunpack.c.l.b16 %v549
        %v682 = vunpack.c.l.b16 %v550
        %v683 = vunpack.c.l.b16 %v551
        %v684 = vunpack.c.l.b16 %v552
        %v685 = vunpack.c.l.b16 %v553
        %v686 = vunpack.c.l.b16 %v554
        %v687 = vunpack.c.l.b16 %v555
        %v688 = vunpack.c.l.b16 %v556
        %v689 = vpack.c.b16 %v626, %v625
        %v690 = vpack.c.b16 %v628, %v627
        %v691 = vpack.c.b16 %v630, %v629
        %v692 = vpack.c.b16 %v632, %v631
        %v693 = vpack.c.b16 %v634, %v633
        %v694 = vpack.c.b16 %v636, %v635
        %v695 = vpack.c.b16 %v638, %v637
        %v696 = vpack.c.b16 %v640, %v639
        %v697 = vpack.c.b16 %v642, %v641
        %v698 = vpack.c.b16 %v644, %v643
        %v699 = vpack.c.b16 %v646, %v645
        %v700 = vpack.c.b16 %v648, %v647
        %v701 = vpack.c.b16 %v650, %v649
        %v702 = vpack.c.b16 %v652, %v651
        %v703 = vpack.c.b16 %v654, %v653
        %v704 = vpack.c.b16 %v656, %v655
        %v705 = vpack.c.b16 %v658, %v657
        %v706 = vpack.c.b16 %v660, %v659
        %v707 = vpack.c.b16 %v662, %v661
        %v708 = vpack.c.b16 %v664, %v663
        %v709 = vpack.c.b16 %v666, %v665
        %v710 = vpack.c.b16 %v668, %v667
        %v711 = vpack.c.b16 %v670, %v669
        %v712 = vpack.c.b16 %v672, %v671
        %v713 = vpack.c.b16 %v674, %v673
        %v714 = vpack.c.b16 %v676, %v675
        %v715 = vpack.c.b16 %v678, %v677
        %v716 = vpack.c.b16 %v680, %v679
        %v717 = vpack.c.b16 %v682, %v681
        %v718 = vpack.c.b16 %v684, %v683
        %v719 = vpack.c.b16 %v686, %v685
        %v720 = vpack.c.b16 %v688, %v687
        %753 = vmatprep.subr.bf16.mxu0 0
        %754 = vmatpush1.bf16.msra.mxu0 %v689
        %755 = vmatprep.subr.bf16.mxu0 0
        %756 = vmatpush1.bf16.msra.mxu0 %v690
        %757 = vmatprep.subr.bf16.mxu0 0
        %758 = vmatpush1.bf16.msra.mxu0 %v691
        %759 = vmatprep.subr.bf16.mxu0 0
        %760 = vmatpush1.bf16.msra.mxu0 %v692
        %761 = vmatprep.subr.bf16.mxu0 0
        %762 = vmatpush1.bf16.msra.mxu0 %v693
        %763 = vmatprep.subr.bf16.mxu0 0
        %764 = vmatpush1.bf16.msra.mxu0 %v694
        %765 = vmatprep.subr.bf16.mxu0 0
        %766 = vmatpush1.bf16.msra.mxu0 %v695
        %767 = vmatprep.subr.bf16.mxu0 0
        %768 = vmatpush1.bf16.msra.mxu0 %v696
        %769 = vmatprep.subr.bf16.mxu0 0
        %770 = vmatpush1.bf16.msra.mxu0 %v697
        %771 = vmatprep.subr.bf16.mxu0 0
        %772 = vmatpush1.bf16.msra.mxu0 %v698
        %773 = vmatprep.subr.bf16.mxu0 0
        %774 = vmatpush1.bf16.msra.mxu0 %v699
        %775 = vmatprep.subr.bf16.mxu0 0
        %776 = vmatpush1.bf16.msra.mxu0 %v700
        %777 = vmatprep.subr.bf16.mxu0 0
        %778 = vmatpush1.bf16.msra.mxu0 %v701
        %779 = vmatprep.subr.bf16.mxu0 0
        %780 = vmatpush1.bf16.msra.mxu0 %v702
        %781 = vmatprep.subr.bf16.mxu0 0
        %782 = vmatpush1.bf16.msra.mxu0 %v703
        %783 = vmatprep.subr.bf16.mxu0 0
        %784 = vmatpush1.bf16.msra.mxu0 %v704
        %785 = vmatprep.mubr.bf16.mxu0 %v430
        %786 = vmatmul.mubr.bf16.gmra.mrb[0].mxu0 %v429
        %v787 = vpop.f32.mrb[0].mxu0
        %v788 = vadd.f32 %v560, %v787
        %v789 = vpop.f32.mrb[0].mxu0
        %v790 = vpop.f32.mrb[0].mxu0
        %v791 = vadd.f32 %v560, %v790
        %v792 = vpop.f32.mrb[0].mxu0
        %793 = vmatprep.mubr.bf16.mxu0 %v434
        %794 = vmatmul.mubr.bf16.gmra.mrb[0].mxu0 %v433
        %v795 = vpop.f32.mrb[0].mxu0
        %v796 = vadd.f32 %v560, %v795
        %v797 = vpop.f32.mrb[0].mxu0
        %v798 = vpop.f32.mrb[0].mxu0
        %v799 = vadd.f32 %v560, %v798
        %v800 = vpop.f32.mrb[0].mxu0
        %801 = vmatprep.mubr.bf16.mxu0 %v438
        %802 = vmatmul.mubr.bf16.gmra.mrb[0].mxu0 %v437
        %v803 = vpop.f32.mrb[0].mxu0
        %v804 = vadd.f32 %v560, %v803
        %v805 = vpop.f32.mrb[0].mxu0
        %v806 = vpop.f32.mrb[0].mxu0
        %v807 = vadd.f32 %v560, %v806
        %v808 = vpop.f32.mrb[0].mxu0
        %809 = vmatprep.mubr.bf16.mxu0 %v442
        %810 = vmatmul.mubr.bf16.gmra.mrb[0].mxu0 %v441
        %v811 = vpop.f32.mrb[0].mxu0
        %v812 = vadd.f32 %v560, %v811
        %v813 = vpop.f32.mrb[0].mxu0
        %v814 = vpop.f32.mrb[0].mxu0
        %v815 = vadd.f32 %v560, %v814
        %v816 = vpop.f32.mrb[0].mxu0
        %817 = vmatprep.mubr.bf16.mxu0 %v446
        %818 = vmatmul.mubr.bf16.gmra.mrb[0].mxu0 %v445
        %v819 = vpop.f32.mrb[0].mxu0
        %v820 = vadd.f32 %v560, %v819
        %v821 = vpop.f32.mrb[0].mxu0
        %v822 = vpop.f32.mrb[0].mxu0
        %v823 = vadd.f32 %v560, %v822
        %v824 = vpop.f32.mrb[0].mxu0
        %825 = vmatprep.mubr.bf16.mxu0 %v450
        %826 = vmatmul.mubr.bf16.gmra.mrb[0].mxu0 %v449
        %v827 = vpop.f32.mrb[0].mxu0
        %v828 = vadd.f32 %v560, %v827
        %v829 = vpop.f32.mrb[0].mxu0
        %v830 = vpop.f32.mrb[0].mxu0
        %v831 = vadd.f32 %v560, %v830
        %v832 = vpop.f32.mrb[0].mxu0
        %833 = vmatprep.mubr.bf16.mxu0 %v454
        %834 = vmatmul.mubr.bf16.gmra.mrb[0].mxu0 %v453
        %v835 = vpop.f32.mrb[0].mxu0
        %v836 = vadd.f32 %v560, %v835
        %v837 = vpop.f32.mrb[0].mxu0
        %v838 = vpop.f32.mrb[0].mxu0
        %v839 = vadd.f32 %v560, %v838
        %v840 = vpop.f32.mrb[0].mxu0
        %841 = vmatprep.mubr.bf16.mxu0 %v458
        %842 = vmatmul.mubr.bf16.gmra.mrb[0].mxu0 %v457
        %v843 = vpop.f32.mrb[0].mxu0
        %v844 = vadd.f32 %v560, %v843
        %v845 = vpop.f32.mrb[0].mxu0
        %v846 = vpop.f32.mrb[0].mxu0
        %v847 = vadd.f32 %v560, %v846
        %v848 = vpop.f32.mrb[0].mxu0
        %849 = vmatprep.mubr.bf16.mxu0 %v462
        %850 = vmatmul.mubr.bf16.gmra.mrb[0].mxu0 %v461
        %v851 = vpop.f32.mrb[0].mxu0
        %v852 = vadd.f32 %v560, %v851
        %v853 = vpop.f32.mrb[0].mxu0
        %v854 = vpop.f32.mrb[0].mxu0
        %v855 = vadd.f32 %v560, %v854
        %v856 = vpop.f32.mrb[0].mxu0
        %857 = vmatprep.mubr.bf16.mxu0 %v466
        %858 = vmatmul.mubr.bf16.gmra.mrb[0].mxu0 %v465
        %v859 = vpop.f32.mrb[0].mxu0
        %v860 = vadd.f32 %v560, %v859
        %v861 = vpop.f32.mrb[0].mxu0
        %v862 = vpop.f32.mrb[0].mxu0
        %v863 = vadd.f32 %v560, %v862
        %v864 = vpop.f32.mrb[0].mxu0
        %865 = vmatprep.mubr.bf16.mxu0 %v470
        %866 = vmatmul.mubr.bf16.gmra.mrb[0].mxu0 %v469
        %v867 = vpop.f32.mrb[0].mxu0
        %v868 = vadd.f32 %v560, %v867
        %v869 = vpop.f32.mrb[0].mxu0
        %v870 = vpop.f32.mrb[0].mxu0
        %v871 = vadd.f32 %v560, %v870
        %v872 = vpop.f32.mrb[0].mxu0
        %873 = vmatprep.mubr.bf16.mxu0 %v474
        %874 = vmatmul.mubr.bf16.gmra.mrb[0].mxu0 %v473
        %v875 = vpop.f32.mrb[0].mxu0
        %v876 = vadd.f32 %v560, %v875
        %v877 = vpop.f32.mrb[0].mxu0
        %v878 = vpop.f32.mrb[0].mxu0
        %v879 = vadd.f32 %v560, %v878
        %v880 = vpop.f32.mrb[0].mxu0
        %881 = vmatprep.mubr.bf16.mxu0 %v478
        %882 = vmatmul.mubr.bf16.gmra.mrb[0].mxu0 %v477
        %v883 = vpop.f32.mrb[0].mxu0
        %v884 = vadd.f32 %v560, %v883
        %v885 = vpop.f32.mrb[0].mxu0
        %v886 = vpop.f32.mrb[0].mxu0
        %v887 = vadd.f32 %v560, %v886
        %v888 = vpop.f32.mrb[0].mxu0
        %889 = vmatprep.mubr.bf16.mxu0 %v482
        %890 = vmatmul.mubr.bf16.gmra.mrb[0].mxu0 %v481
        %v891 = vpop.f32.mrb[0].mxu0
        %v892 = vadd.f32 %v560, %v891
        %v893 = vpop.f32.mrb[0].mxu0
        %v894 = vpop.f32.mrb[0].mxu0
        %v895 = vadd.f32 %v560, %v894
        %v896 = vpop.f32.mrb[0].mxu0
        %897 = vmatprep.mubr.bf16.mxu0 %v486
        %898 = vmatmul.mubr.bf16.gmra.mrb[0].mxu0 %v485
        %v899 = vpop.f32.mrb[0].mxu0
        %v900 = vadd.f32 %v560, %v899
        %v901 = vpop.f32.mrb[0].mxu0
        %v902 = vpop.f32.mrb[0].mxu0
        %v903 = vadd.f32 %v560, %v902
        %v904 = vpop.f32.mrb[0].mxu0
        %905 = vmatprep.mubr.bf16.mxu0 %v490
        %906 = vmatmul.mubr.bf16.gmra.mrb[0].mxu0 %v489
        %v907 = vpop.f32.mrb[0].mxu0
        %v908 = vadd.f32 %v560, %v907
        %v909 = vpop.f32.mrb[0].mxu0
        %v910 = vpop.f32.mrb[0].mxu0
        %v911 = vadd.f32 %v560, %v910
        %v912 = vpop.f32.mrb[0].mxu0
        %913 = vdwg.mxu0
        %914 = vmatprep.subr.bf16.mxu0 0
        %915 = vmatpush1.bf16.msra.mxu0 %v705
        %916 = vmatprep.subr.bf16.mxu0 0
        %917 = vmatpush1.bf16.msra.mxu0 %v706
        %918 = vmatprep.subr.bf16.mxu0 0
        %919 = vmatpush1.bf16.msra.mxu0 %v707
        %920 = vmatprep.subr.bf16.mxu0 0
        %921 = vmatpush1.bf16.msra.mxu0 %v708
        %922 = vmatprep.subr.bf16.mxu0 0
        %923 = vmatpush1.bf16.msra.mxu0 %v709
        %924 = vmatprep.subr.bf16.mxu0 0
        %925 = vmatpush1.bf16.msra.mxu0 %v710
        %926 = vmatprep.subr.bf16.mxu0 0
        %927 = vmatpush1.bf16.msra.mxu0 %v711
        %928 = vmatprep.subr.bf16.mxu0 0
        %929 = vmatpush1.bf16.msra.mxu0 %v712
        %930 = vmatprep.subr.bf16.mxu0 0
        %931 = vmatpush1.bf16.msra.mxu0 %v713
        %932 = vmatprep.subr.bf16.mxu0 0
        %933 = vmatpush1.bf16.msra.mxu0 %v714
        %934 = vmatprep.subr.bf16.mxu0 0
        %935 = vmatpush1.bf16.msra.mxu0 %v715
        %936 = vmatprep.subr.bf16.mxu0 0
        %937 = vmatpush1.bf16.msra.mxu0 %v716
        %938 = vmatprep.subr.bf16.mxu0 0
        %939 = vmatpush1.bf16.msra.mxu0 %v717
        %940 = vmatprep.subr.bf16.mxu0 0
        %941 = vmatpush1.bf16.msra.mxu0 %v718
        %942 = vmatprep.subr.bf16.mxu0 0
        %943 = vmatpush1.bf16.msra.mxu0 %v719
        %944 = vmatprep.subr.bf16.mxu0 0
        %945 = vmatpush1.bf16.msra.mxu0 %v720
        %946 = vmatprep.mubr.bf16.mxu0 %v432
        %947 = vmatmul.mubr.bf16.gmra.mrb[0].mxu0 %v431
        %v948 = vpop.f32.mrb[0].mxu0
        %v949 = vadd.f32 %v788, %v948
        %v950 = vpop.f32.mrb[0].mxu0
        %v951 = vpop.f32.mrb[0].mxu0
        %v952 = vadd.f32 %v791, %v951
        %v953 = vpop.f32.mrb[0].mxu0
        %954 = vmatprep.mubr.bf16.mxu0 %v436
        %955 = vmatmul.mubr.bf16.gmra.mrb[0].mxu0 %v435
        %v956 = vpop.f32.mrb[0].mxu0
        %v957 = vadd.f32 %v796, %v956
        %v958 = vpop.f32.mrb[0].mxu0
        %v959 = vpop.f32.mrb[0].mxu0
        %v960 = vadd.f32 %v799, %v959
        %v961 = vpop.f32.mrb[0].mxu0
        %962 = vmatprep.mubr.bf16.mxu0 %v440
        %963 = vmatmul.mubr.bf16.gmra.mrb[0].mxu0 %v439
        %v964 = vpop.f32.mrb[0].mxu0
        %v965 = vadd.f32 %v804, %v964
        %v966 = vpop.f32.mrb[0].mxu0
        %v967 = vpop.f32.mrb[0].mxu0
        %v968 = vadd.f32 %v807, %v967
        %v969 = vpop.f32.mrb[0].mxu0
        %970 = vmatprep.mubr.bf16.mxu0 %v444
        %971 = vmatmul.mubr.bf16.gmra.mrb[0].mxu0 %v443
        %v972 = vpop.f32.mrb[0].mxu0
        %v973 = vadd.f32 %v812, %v972
        %v974 = vpop.f32.mrb[0].mxu0
        %v975 = vpop.f32.mrb[0].mxu0
        %v976 = vadd.f32 %v815, %v975
        %v977 = vpop.f32.mrb[0].mxu0
        %978 = vmatprep.mubr.bf16.mxu0 %v448
        %979 = vmatmul.mubr.bf16.gmra.mrb[0].mxu0 %v447
        %v980 = vpop.f32.mrb[0].mxu0
        %v981 = vadd.f32 %v820, %v980
        %v982 = vpop.f32.mrb[0].mxu0
        %v983 = vpop.f32.mrb[0].mxu0
        %v984 = vadd.f32 %v823, %v983
        %v985 = vpop.f32.mrb[0].mxu0
        %986 = vmatprep.mubr.bf16.mxu0 %v452
        %987 = vmatmul.mubr.bf16.gmra.mrb[0].mxu0 %v451
        %v988 = vpop.f32.mrb[0].mxu0
        %v989 = vadd.f32 %v828, %v988
        %v990 = vpop.f32.mrb[0].mxu0
        %v991 = vpop.f32.mrb[0].mxu0
        %v992 = vadd.f32 %v831, %v991
        %v993 = vpop.f32.mrb[0].mxu0
        %994 = vmatprep.mubr.bf16.mxu0 %v456
        %995 = vmatmul.mubr.bf16.gmra.mrb[0].mxu0 %v455
        %v996 = vpop.f32.mrb[0].mxu0
        %v997 = vadd.f32 %v836, %v996
        %v998 = vpop.f32.mrb[0].mxu0
        %v999 = vpop.f32.mrb[0].mxu0
        %v1000 = vadd.f32 %v839, %v999
        %v1001 = vpop.f32.mrb[0].mxu0
        %1002 = vmatprep.mubr.bf16.mxu0 %v460
        %1003 = vmatmul.mubr.bf16.gmra.mrb[0].mxu0 %v459
        %v1004 = vpop.f32.mrb[0].mxu0
        %v1005 = vadd.f32 %v844, %v1004
        %v1006 = vpop.f32.mrb[0].mxu0
        %v1007 = vpop.f32.mrb[0].mxu0
        %v1008 = vadd.f32 %v847, %v1007
        %v1009 = vpop.f32.mrb[0].mxu0
        %1010 = vmatprep.mubr.bf16.mxu0 %v464
        %1011 = vmatmul.mubr.bf16.gmra.mrb[0].mxu0 %v463
        %v1012 = vpop.f32.mrb[0].mxu0
        %v1013 = vadd.f32 %v852, %v1012
        %v1014 = vpop.f32.mrb[0].mxu0
        %v1015 = vpop.f32.mrb[0].mxu0
        %v1016 = vadd.f32 %v855, %v1015
        %v1017 = vpop.f32.mrb[0].mxu0
        %1018 = vmatprep.mubr.bf16.mxu0 %v468
        %1019 = vmatmul.mubr.bf16.gmra.mrb[0].mxu0 %v467
        %v1020 = vpop.f32.mrb[0].mxu0
        %v1021 = vadd.f32 %v860, %v1020
        %v1022 = vpop.f32.mrb[0].mxu0
        %v1023 = vpop.f32.mrb[0].mxu0
        %v1024 = vadd.f32 %v863, %v1023
        %v1025 = vpop.f32.mrb[0].mxu0
        %1026 = vmatprep.mubr.bf16.mxu0 %v472
        %1027 = vmatmul.mubr.bf16.gmra.mrb[0].mxu0 %v471
        %v1028 = vpop.f32.mrb[0].mxu0
        %v1029 = vadd.f32 %v868, %v1028
        %v1030 = vpop.f32.mrb[0].mxu0
        %v1031 = vpop.f32.mrb[0].mxu0
        %v1032 = vadd.f32 %v871, %v1031
        %v1033 = vpop.f32.mrb[0].mxu0
        %1034 = vmatprep.mubr.bf16.mxu0 %v476
        %1035 = vmatmul.mubr.bf16.gmra.mrb[0].mxu0 %v475
        %v1036 = vpop.f32.mrb[0].mxu0
        %v1037 = vadd.f32 %v876, %v1036
        %v1038 = vpop.f32.mrb[0].mxu0
        %v1039 = vpop.f32.mrb[0].mxu0
        %v1040 = vadd.f32 %v879, %v1039
        %v1041 = vpop.f32.mrb[0].mxu0
        %1042 = vmatprep.mubr.bf16.mxu0 %v480
        %1043 = vmatmul.mubr.bf16.gmra.mrb[0].mxu0 %v479
        %v1044 = vpop.f32.mrb[0].mxu0
        %v1045 = vadd.f32 %v884, %v1044
        %v1046 = vpop.f32.mrb[0].mxu0
        %v1047 = vpop.f32.mrb[0].mxu0
        %v1048 = vadd.f32 %v887, %v1047
        %v1049 = vpop.f32.mrb[0].mxu0
        %1050 = vmatprep.mubr.bf16.mxu0 %v484
        %1051 = vmatmul.mubr.bf16.gmra.mrb[0].mxu0 %v483
        %v1052 = vpop.f32.mrb[0].mxu0
        %v1053 = vadd.f32 %v892, %v1052
        %v1054 = vpop.f32.mrb[0].mxu0
        %v1055 = vpop.f32.mrb[0].mxu0
        %v1056 = vadd.f32 %v895, %v1055
        %v1057 = vpop.f32.mrb[0].mxu0
        %1058 = vmatprep.mubr.bf16.mxu0 %v488
        %1059 = vmatmul.mubr.bf16.gmra.mrb[0].mxu0 %v487
        %v1060 = vpop.f32.mrb[0].mxu0
        %v1061 = vadd.f32 %v900, %v1060
        %v1062 = vpop.f32.mrb[0].mxu0
        %v1063 = vpop.f32.mrb[0].mxu0
        %v1064 = vadd.f32 %v903, %v1063
        %v1065 = vpop.f32.mrb[0].mxu0
        %1066 = vmatprep.mubr.bf16.mxu0 %v492
        %1067 = vmatmul.mubr.bf16.gmra.mrb[0].mxu0 %v491
        %v1068 = vpop.f32.mrb[0].mxu0
        %v1069 = vadd.f32 %v908, %v1068
        %v1070 = vpop.f32.mrb[0].mxu0
        %v1071 = vpop.f32.mrb[0].mxu0
        %v1072 = vadd.f32 %v911, %v1071
        %v1073 = vpop.f32.mrb[0].mxu0
        %1074 = vdwg.mxu0
        %v1075 = vpack.c.bf16 %v952, %v949
        %v1076 = vpack.c.bf16 %v960, %v957
        %v1077 = vpack.c.bf16 %v968, %v965
        %v1078 = vpack.c.bf16 %v976, %v973
        %v1079 = vpack.c.bf16 %v984, %v981
        %v1080 = vpack.c.bf16 %v992, %v989
        %v1081 = vpack.c.bf16 %v1000, %v997
        %v1082 = vpack.c.bf16 %v1008, %v1005
        %v1083 = vpack.c.bf16 %v1016, %v1013
        %v1084 = vpack.c.bf16 %v1024, %v1021
        %v1085 = vpack.c.bf16 %v1032, %v1029
        %v1086 = vpack.c.bf16 %v1040, %v1037
        %v1087 = vpack.c.bf16 %v1048, %v1045
        %v1088 = vpack.c.bf16 %v1056, %v1053
        %v1089 = vpack.c.bf16 %v1064, %v1061
        %v1090 = vpack.c.bf16 %v1072, %v1069
        %v1091 = vld [vmem:[%s3] sm:$0xf]
        %v1092 = vld [vmem:[%s3 + $0x4] sm:$0xf]
        %v1093 = vld [vmem:[%s3 + $0x8] sm:$0xf]
        %v1094 = vld [vmem:[%s3 + $0xc] sm:$0xf]
        %v1095 = vld [vmem:[%s3 + $0x10] sm:$0xf]
        %v1096 = vld [vmem:[%s3 + $0x14] sm:$0xf]
        %v1097 = vld [vmem:[%s3 + $0x18] sm:$0xf]
        %v1098 = vld [vmem:[%s3 + $0x1c] sm:$0xf]
        %v1099 = vld [vmem:[%s3 + $0x20] sm:$0xf]
        %v1100 = vld [vmem:[%s3 + $0x24] sm:$0xf]
        %v1101 = vld [vmem:[%s3 + $0x28] sm:$0xf]
        %v1102 = vld [vmem:[%s3 + $0x2c] sm:$0xf]
        %v1103 = vld [vmem:[%s3 + $0x30] sm:$0xf]
        %v1104 = vld [vmem:[%s3 + $0x34] sm:$0xf]
        %v1105 = vld [vmem:[%s3 + $0x38] sm:$0xf]
        %v1106 = vld [vmem:[%s3 + $0x3c] sm:$0xf]
        %v1107 = vlaneseq
        %v1108 = vshrl.u32 %v1107, 7
        %v1109 = vsub.s32 0, %v1108
        %v1110 = vrot.slane %v300, %v1109
        %v1127 = vunpack.c.l.b16 %v1091
        %v1128 = vunpack.c.l.b16 %v1092
        %v1129 = vunpack.c.l.b16 %v1093
        %v1130 = vunpack.c.l.b16 %v1094
        %v1131 = vunpack.c.l.b16 %v1095
        %v1132 = vunpack.c.l.b16 %v1096
        %v1133 = vunpack.c.l.b16 %v1097
        %v1134 = vunpack.c.l.b16 %v1098
        %v1135 = vunpack.c.l.b16 %v1099
        %v1136 = vunpack.c.l.b16 %v1100
        %v1137 = vunpack.c.l.b16 %v1101
        %v1138 = vunpack.c.l.b16 %v1102
        %v1139 = vunpack.c.l.b16 %v1103
        %v1140 = vunpack.c.l.b16 %v1104
        %v1141 = vunpack.c.l.b16 %v1105
        %v1142 = vunpack.c.l.b16 %v1106
        %v1143 = vpack.c.b16 %v1128, %v1127
        %v1144 = vpack.c.b16 %v1130, %v1129
        %v1145 = vpack.c.b16 %v1132, %v1131
        %v1146 = vpack.c.b16 %v1134, %v1133
        %v1147 = vpack.c.b16 %v1136, %v1135
        %v1148 = vpack.c.b16 %v1138, %v1137
        %v1149 = vpack.c.b16 %v1140, %v1139
        %v1150 = vpack.c.b16 %v1142, %v1141
        %1159 = vmatprep.subr.bf16.mxu0 0
        %1160 = vmatpush1.bf16.msra.mxu0 %v1143
        %1161 = vmatprep.subr.bf16.mxu0 0
        %1162 = vmatpush1.bf16.msra.mxu0 %v1144
        %1163 = vmatprep.subr.bf16.mxu0 0
        %1164 = vmatpush1.bf16.msra.mxu0 %v1145
        %1165 = vmatprep.subr.bf16.mxu0 0
        %1166 = vmatpush1.bf16.msra.mxu0 %v1146
        %1167 = vmatprep.subr.bf16.mxu0 0
        %1168 = vmatpush1.bf16.msra.mxu0 %v1147
        %1169 = vmatprep.subr.bf16.mxu0 0
        %1170 = vmatpush1.bf16.msra.mxu0 %v1148
        %1171 = vmatprep.subr.bf16.mxu0 0
        %1172 = vmatpush1.bf16.msra.mxu0 %v1149
        %1173 = vmatprep.subr.bf16.mxu0 0
        %1174 = vmatpush1.bf16.msra.mxu0 %v1150
        %1175 = vmatprep.subr.bf16.mxu0 0
        %1176 = vmatpush1.bf16.msra.mxu0 0
        %1177 = vmatprep.subr.bf16.mxu0 0
        %1178 = vmatpush1.bf16.msra.mxu0 0
        %1179 = vmatprep.subr.bf16.mxu0 0
        %1180 = vmatpush1.bf16.msra.mxu0 0
        %1181 = vmatprep.subr.bf16.mxu0 0
        %1182 = vmatpush1.bf16.msra.mxu0 0
        %1183 = vmatprep.subr.bf16.mxu0 0
        %1184 = vmatpush1.bf16.msra.mxu0 0
        %1185 = vmatprep.subr.bf16.mxu0 0
        %1186 = vmatpush1.bf16.msra.mxu0 0
        %1187 = vmatprep.subr.bf16.mxu0 0
        %1188 = vmatpush1.bf16.msra.mxu0 0
        %1189 = vmatprep.subr.bf16.mxu0 0
        %1190 = vmatpush1.bf16.msra.mxu0 0
        %1191 = vmatprep.mubr.bf16.mxu0 0
        %1192 = vmatmul.mubr.bf16.gmra.mrb[0].mxu0 %v1075
        %v1193 = vpop.f32.mrb[0].mxu0
        %v1194 = vadd.f32 %v1110, %v1193
        %v1195 = vpop.f32.mrb[0].mxu0
        %v1196 = vpop.f32.mrb[0].mxu0
        %v1197 = vadd.f32 %v1110, %v1196
        %v1198 = vpop.f32.mrb[0].mxu0
        %1199 = vmatprep.mubr.bf16.mxu0 0
        %1200 = vmatmul.mubr.bf16.gmra.mrb[0].mxu0 %v1076
        %v1201 = vpop.f32.mrb[0].mxu0
        %v1202 = vadd.f32 %v1110, %v1201
        %v1203 = vpop.f32.mrb[0].mxu0
        %v1204 = vpop.f32.mrb[0].mxu0
        %v1205 = vadd.f32 %v1110, %v1204
        %v1206 = vpop.f32.mrb[0].mxu0
        %1207 = vmatprep.mubr.bf16.mxu0 0
        %1208 = vmatmul.mubr.bf16.gmra.mrb[0].mxu0 %v1077
        %v1209 = vpop.f32.mrb[0].mxu0
        %v1210 = vadd.f32 %v1110, %v1209
        %v1211 = vpop.f32.mrb[0].mxu0
        %v1212 = vpop.f32.mrb[0].mxu0
        %v1213 = vadd.f32 %v1110, %v1212
        %v1214 = vpop.f32.mrb[0].mxu0
        %1215 = vmatprep.mubr.bf16.mxu0 0
        %1216 = vmatmul.mubr.bf16.gmra.mrb[0].mxu0 %v1078
        %v1217 = vpop.f32.mrb[0].mxu0
        %v1218 = vadd.f32 %v1110, %v1217
        %v1219 = vpop.f32.mrb[0].mxu0
        %v1220 = vpop.f32.mrb[0].mxu0
        %v1221 = vadd.f32 %v1110, %v1220
        %v1222 = vpop.f32.mrb[0].mxu0
        %1223 = vmatprep.mubr.bf16.mxu0 0
        %1224 = vmatmul.mubr.bf16.gmra.mrb[0].mxu0 %v1079
        %v1225 = vpop.f32.mrb[0].mxu0
        %v1226 = vadd.f32 %v1110, %v1225
        %v1227 = vpop.f32.mrb[0].mxu0
        %v1228 = vpop.f32.mrb[0].mxu0
        %v1229 = vadd.f32 %v1110, %v1228
        %v1230 = vpop.f32.mrb[0].mxu0
        %1231 = vmatprep.mubr.bf16.mxu0 0
        %1232 = vmatmul.mubr.bf16.gmra.mrb[0].mxu0 %v1080
        %v1233 = vpop.f32.mrb[0].mxu0
        %v1234 = vadd.f32 %v1110, %v1233
        %v1235 = vpop.f32.mrb[0].mxu0
        %v1236 = vpop.f32.mrb[0].mxu0
        %v1237 = vadd.f32 %v1110, %v1236
        %v1238 = vpop.f32.mrb[0].mxu0
        %1239 = vmatprep.mubr.bf16.mxu0 0
        %1240 = vmatmul.mubr.bf16.gmra.mrb[0].mxu0 %v1081
        %v1241 = vpop.f32.mrb[0].mxu0
        %v1242 = vadd.f32 %v1110, %v1241
        %v1243 = vpop.f32.mrb[0].mxu0
        %v1244 = vpop.f32.mrb[0].mxu0
        %v1245 = vadd.f32 %v1110, %v1244
        %v1246 = vpop.f32.mrb[0].mxu0
        %1247 = vmatprep.mubr.bf16.mxu0 0
        %1248 = vmatmul.mubr.bf16.gmra.mrb[0].mxu0 %v1082
        %v1249 = vpop.f32.mrb[0].mxu0
        %v1250 = vadd.f32 %v1110, %v1249
        %v1251 = vpop.f32.mrb[0].mxu0
        %v1252 = vpop.f32.mrb[0].mxu0
        %v1253 = vadd.f32 %v1110, %v1252
        %v1254 = vpop.f32.mrb[0].mxu0
        %1255 = vmatprep.mubr.bf16.mxu0 0
        %1256 = vmatmul.mubr.bf16.gmra.mrb[0].mxu0 %v1083
        %v1257 = vpop.f32.mrb[0].mxu0
        %v1258 = vadd.f32 %v1110, %v1257
        %v1259 = vpop.f32.mrb[0].mxu0
        %v1260 = vpop.f32.mrb[0].mxu0
        %v1261 = vadd.f32 %v1110, %v1260
        %v1262 = vpop.f32.mrb[0].mxu0
        %1263 = vmatprep.mubr.bf16.mxu0 0
        %1264 = vmatmul.mubr.bf16.gmra.mrb[0].mxu0 %v1084
        %v1265 = vpop.f32.mrb[0].mxu0
        %v1266 = vadd.f32 %v1110, %v1265
        %v1267 = vpop.f32.mrb[0].mxu0
        %v1268 = vpop.f32.mrb[0].mxu0
        %v1269 = vadd.f32 %v1110, %v1268
        %v1270 = vpop.f32.mrb[0].mxu0
        %1271 = vmatprep.mubr.bf16.mxu0 0
        %1272 = vmatmul.mubr.bf16.gmra.mrb[0].mxu0 %v1085
        %v1273 = vpop.f32.mrb[0].mxu0
        %v1274 = vadd.f32 %v1110, %v1273
        %v1275 = vpop.f32.mrb[0].mxu0
        %v1276 = vpop.f32.mrb[0].mxu0
        %v1277 = vadd.f32 %v1110, %v1276
        %v1278 = vpop.f32.mrb[0].mxu0
        %1279 = vmatprep.mubr.bf16.mxu0 0
        %1280 = vmatmul.mubr.bf16.gmra.mrb[0].mxu0 %v1086
        %v1281 = vpop.f32.mrb[0].mxu0
        %v1282 = vadd.f32 %v1110, %v1281
        %v1283 = vpop.f32.mrb[0].mxu0
        %v1284 = vpop.f32.mrb[0].mxu0
        %v1285 = vadd.f32 %v1110, %v1284
        %v1286 = vpop.f32.mrb[0].mxu0
        %1287 = vmatprep.mubr.bf16.mxu0 0
        %1288 = vmatmul.mubr.bf16.gmra.mrb[0].mxu0 %v1087
        %v1289 = vpop.f32.mrb[0].mxu0
        %v1290 = vadd.f32 %v1110, %v1289
        %v1291 = vpop.f32.mrb[0].mxu0
        %v1292 = vpop.f32.mrb[0].mxu0
        %v1293 = vadd.f32 %v1110, %v1292
        %v1294 = vpop.f32.mrb[0].mxu0
        %1295 = vmatprep.mubr.bf16.mxu0 0
        %1296 = vmatmul.mubr.bf16.gmra.mrb[0].mxu0 %v1088
        %v1297 = vpop.f32.mrb[0].mxu0
        %v1298 = vadd.f32 %v1110, %v1297
        %v1299 = vpop.f32.mrb[0].mxu0
        %v1300 = vpop.f32.mrb[0].mxu0
        %v1301 = vadd.f32 %v1110, %v1300
        %v1302 = vpop.f32.mrb[0].mxu0
        %1303 = vmatprep.mubr.bf16.mxu0 0
        %1304 = vmatmul.mubr.bf16.gmra.mrb[0].mxu0 %v1089
        %v1305 = vpop.f32.mrb[0].mxu0
        %v1306 = vadd.f32 %v1110, %v1305
        %v1307 = vpop.f32.mrb[0].mxu0
        %v1308 = vpop.f32.mrb[0].mxu0
        %v1309 = vadd.f32 %v1110, %v1308
        %v1310 = vpop.f32.mrb[0].mxu0
        %1311 = vmatprep.mubr.bf16.mxu0 0
        %1312 = vmatmul.mubr.bf16.gmra.mrb[0].mxu0 %v1090
        %v1313 = vpop.f32.mrb[0].mxu0
        %v1314 = vadd.f32 %v1110, %v1313
        %v1315 = vpop.f32.mrb[0].mxu0
        %v1316 = vpop.f32.mrb[0].mxu0
        %v1317 = vadd.f32 %v1110, %v1316
        %v1318 = vpop.f32.mrb[0].mxu0
        %1319 = vdwg.mxu0
        %v1320 = vmul.f32 %v1194, 0.5
        %v1321 = vmul.f32 %v1197, 0.5
        %v1322 = vmul.f32 %v1202, 0.5
        %v1323 = vmul.f32 %v1205, 0.5
        %v1324 = vmul.f32 %v1210, 0.5
        %v1325 = vmul.f32 %v1213, 0.5
        %v1326 = vmul.f32 %v1218, 0.5
        %v1327 = vmul.f32 %v1221, 0.5
        %v1328 = vmul.f32 %v1226, 0.5
        %v1329 = vmul.f32 %v1229, 0.5
        %v1330 = vmul.f32 %v1234, 0.5
        %v1331 = vmul.f32 %v1237, 0.5
        %v1332 = vmul.f32 %v1242, 0.5
        %v1333 = vmul.f32 %v1245, 0.5
        %v1334 = vmul.f32 %v1250, 0.5
        %v1335 = vmul.f32 %v1253, 0.5
        %v1336 = vmul.f32 %v1258, 0.5
        %v1337 = vmul.f32 %v1261, 0.5
        %v1338 = vmul.f32 %v1266, 0.5
        %v1339 = vmul.f32 %v1269, 0.5
        %v1340 = vmul.f32 %v1274, 0.5
        %v1341 = vmul.f32 %v1277, 0.5
        %v1342 = vmul.f32 %v1282, 0.5
        %v1343 = vmul.f32 %v1285, 0.5
        %v1344 = vmul.f32 %v1290, 0.5
        %v1345 = vmul.f32 %v1293, 0.5
        %v1346 = vmul.f32 %v1298, 0.5
        %v1347 = vmul.f32 %v1301, 0.5
        %v1348 = vmul.f32 %v1306, 0.5
        %v1349 = vmul.f32 %v1309, 0.5
        %v1350 = vmul.f32 %v1314, 0.5
        %v1351 = vmul.f32 %v1317, 0.5
        %v1352 = vmul.f32 %v1194, 0.70710677
        %v1353 = vmul.f32 %v1197, 0.70710677
        %v1354 = vmul.f32 %v1202, 0.70710677
        %v1355 = vmul.f32 %v1205, 0.70710677
        %v1356 = vmul.f32 %v1210, 0.70710677
        %v1357 = vmul.f32 %v1213, 0.70710677
        %v1358 = vmul.f32 %v1218, 0.70710677
        %v1359 = vmul.f32 %v1221, 0.70710677
        %v1360 = vmul.f32 %v1226, 0.70710677
        %v1361 = vmul.f32 %v1229, 0.70710677
        %v1362 = vmul.f32 %v1234, 0.70710677
        %v1363 = vmul.f32 %v1237, 0.70710677
        %v1364 = vmul.f32 %v1242, 0.70710677
        %v1365 = vmul.f32 %v1245, 0.70710677
        %v1366 = vmul.f32 %v1250, 0.70710677
        %v1367 = vmul.f32 %v1253, 0.70710677
        %v1368 = vmul.f32 %v1258, 0.70710677
        %v1369 = vmul.f32 %v1261, 0.70710677
        %v1370 = vmul.f32 %v1266, 0.70710677
        %v1371 = vmul.f32 %v1269, 0.70710677
        %v1372 = vmul.f32 %v1274, 0.70710677
        %v1373 = vmul.f32 %v1277, 0.70710677
        %v1374 = vmul.f32 %v1282, 0.70710677
        %v1375 = vmul.f32 %v1285, 0.70710677
        %v1376 = vmul.f32 %v1290, 0.70710677
        %v1377 = vmul.f32 %v1293, 0.70710677
        %v1378 = vmul.f32 %v1298, 0.70710677
        %v1379 = vmul.f32 %v1301, 0.70710677
        %v1380 = vmul.f32 %v1306, 0.70710677
        %v1381 = vmul.f32 %v1309, 0.70710677
        %v1382 = vmul.f32 %v1314, 0.70710677
        %v1383 = vmul.f32 %v1317, 0.70710677
        %v1384 = verf.f32.pop %v1352
        %v1385 = verf.f32.pop %v1353
        %v1386 = verf.f32.pop %v1354
        %v1387 = verf.f32.pop %v1355
        %v1388 = verf.f32.pop %v1356
        %v1389 = verf.f32.pop %v1357
        %v1390 = verf.f32.pop %v1358
        %v1391 = verf.f32.pop %v1359
        %v1392 = verf.f32.pop %v1360
        %v1393 = verf.f32.pop %v1361
        %v1394 = verf.f32.pop %v1362
        %v1395 = verf.f32.pop %v1363
        %v1396 = verf.f32.pop %v1364
        %v1397 = verf.f32.pop %v1365
        %v1398 = verf.f32.pop %v1366
        %v1399 = verf.f32.pop %v1367
        %v1400 = verf.f32.pop %v1368
        %v1401 = verf.f32.pop %v1369
        %v1402 = verf.f32.pop %v1370
        %v1403 = verf.f32.pop %v1371
        %v1404 = verf.f32.pop %v1372
        %v1405 = verf.f32.pop %v1373
        %v1406 = verf.f32.pop %v1374
        %v1407 = verf.f32.pop %v1375
        %v1408 = verf.f32.pop %v1376
        %v1409 = verf.f32.pop %v1377
        %v1410 = verf.f32.pop %v1378
        %v1411 = verf.f32.pop %v1379
        %v1412 = verf.f32.pop %v1380
        %v1413 = verf.f32.pop %v1381
        %v1414 = verf.f32.pop %v1382
        %v1415 = verf.f32.pop %v1383
        %v1416 = vadd.f32 %v1384, 1.0
        %v1417 = vadd.f32 %v1385, 1.0
        %v1418 = vadd.f32 %v1386, 1.0
        %v1419 = vadd.f32 %v1387, 1.0
        %v1420 = vadd.f32 %v1388, 1.0
        %v1421 = vadd.f32 %v1389, 1.0
        %v1422 = vadd.f32 %v1390, 1.0
        %v1423 = vadd.f32 %v1391, 1.0
        %v1424 = vadd.f32 %v1392, 1.0
        %v1425 = vadd.f32 %v1393, 1.0
        %v1426 = vadd.f32 %v1394, 1.0
        %v1427 = vadd.f32 %v1395, 1.0
        %v1428 = vadd.f32 %v1396, 1.0
        %v1429 = vadd.f32 %v1397, 1.0
        %v1430 = vadd.f32 %v1398, 1.0
        %v1431 = vadd.f32 %v1399, 1.0
        %v1432 = vadd.f32 %v1400, 1.0
        %v1433 = vadd.f32 %v1401, 1.0
        %v1434 = vadd.f32 %v1402, 1.0
        %v1435 = vadd.f32 %v1403, 1.0
        %v1436 = vadd.f32 %v1404, 1.0
        %v1437 = vadd.f32 %v1405, 1.0
        %v1438 = vadd.f32 %v1406, 1.0
        %v1439 = vadd.f32 %v1407, 1.0
        %v1440 = vadd.f32 %v1408, 1.0
        %v1441 = vadd.f32 %v1409, 1.0
        %v1442 = vadd.f32 %v1410, 1.0
        %v1443 = vadd.f32 %v1411, 1.0
        %v1444 = vadd.f32 %v1412, 1.0
        %v1445 = vadd.f32 %v1413, 1.0
        %v1446 = vadd.f32 %v1414, 1.0
        %v1447 = vadd.f32 %v1415, 1.0
        %v1448 = vmul.f32 %v1320, %v1416
        %v1449 = vmul.f32 %v1321, %v1417
        %v1450 = vmul.f32 %v1322, %v1418
        %v1451 = vmul.f32 %v1323, %v1419
        %v1452 = vmul.f32 %v1324, %v1420
        %v1453 = vmul.f32 %v1325, %v1421
        %v1454 = vmul.f32 %v1326, %v1422
        %v1455 = vmul.f32 %v1327, %v1423
        %v1456 = vmul.f32 %v1328, %v1424
        %v1457 = vmul.f32 %v1329, %v1425
        %v1458 = vmul.f32 %v1330, %v1426
        %v1459 = vmul.f32 %v1331, %v1427
        %v1460 = vmul.f32 %v1332, %v1428
        %v1461 = vmul.f32 %v1333, %v1429
        %v1462 = vmul.f32 %v1334, %v1430
        %v1463 = vmul.f32 %v1335, %v1431
        %v1464 = vmul.f32 %v1336, %v1432
        %v1465 = vmul.f32 %v1337, %v1433
        %v1466 = vmul.f32 %v1338, %v1434
        %v1467 = vmul.f32 %v1339, %v1435
        %v1468 = vmul.f32 %v1340, %v1436
        %v1469 = vmul.f32 %v1341, %v1437
        %v1470 = vmul.f32 %v1342, %v1438
        %v1471 = vmul.f32 %v1343, %v1439
        %v1472 = vmul.f32 %v1344, %v1440
        %v1473 = vmul.f32 %v1345, %v1441
        %v1474 = vmul.f32 %v1346, %v1442
        %v1475 = vmul.f32 %v1347, %v1443
        %v1476 = vmul.f32 %v1348, %v1444
        %v1477 = vmul.f32 %v1349, %v1445
        %v1478 = vmul.f32 %v1350, %v1446
        %v1479 = vmul.f32 %v1351, %v1447
        %v1480 = vpack.c.bf16 %v1449, %v1448
        %v1481 = vpack.c.bf16 %v1451, %v1450
        %v1482 = vpack.c.bf16 %v1453, %v1452
        %v1483 = vpack.c.bf16 %v1455, %v1454
        %v1484 = vpack.c.bf16 %v1457, %v1456
        %v1485 = vpack.c.bf16 %v1459, %v1458
        %v1486 = vpack.c.bf16 %v1461, %v1460
        %v1487 = vpack.c.bf16 %v1463, %v1462
        %v1488 = vpack.c.bf16 %v1465, %v1464
        %v1489 = vpack.c.bf16 %v1467, %v1466
        %v1490 = vpack.c.bf16 %v1469, %v1468
        %v1491 = vpack.c.bf16 %v1471, %v1470
        %v1492 = vpack.c.bf16 %v1473, %v1472
        %v1493 = vpack.c.bf16 %v1475, %v1474
        %v1494 = vpack.c.bf16 %v1477, %v1476
        %v1495 = vpack.c.bf16 %v1479, %v1478
        %v1496 = vld [vmem:[%s4] sm:$0xf]
        %v1497 = vld [vmem:[%s4 + $0x4] sm:$0xf]
        %v1498 = vld [vmem:[%s4 + $0x8] sm:$0xf]
        %v1499 = vld [vmem:[%s4 + $0xc] sm:$0xf]
        %v1500 = vld [vmem:[%s4 + $0x10] sm:$0xf]
        %v1501 = vld [vmem:[%s4 + $0x14] sm:$0xf]
        %v1502 = vld [vmem:[%s4 + $0x18] sm:$0xf]
        %v1503 = vld [vmem:[%s4 + $0x1c] sm:$0xf]
        %v1504 = vld [vmem:[%s4 + $0x20] sm:$0xf]
        %v1505 = vld [vmem:[%s4 + $0x24] sm:$0xf]
        %v1506 = vld [vmem:[%s4 + $0x28] sm:$0xf]
        %v1507 = vld [vmem:[%s4 + $0x2c] sm:$0xf]
        %v1508 = vld [vmem:[%s4 + $0x30] sm:$0xf]
        %v1509 = vld [vmem:[%s4 + $0x34] sm:$0xf]
        %v1510 = vld [vmem:[%s4 + $0x38] sm:$0xf]
        %v1511 = vld [vmem:[%s4 + $0x3c] sm:$0xf]
        %v1512 = vlaneseq
        %v1513 = vshrl.u32 %v1512, 7
        %v1514 = vsub.s32 0, %v1513
        %v1515 = vrot.slane %v297, %v1514
        %v1532 = vunpack.c.l.b16 %v1496
        %v1533 = vunpack.c.l.b16 %v1497
        %v1534 = vunpack.c.l.b16 %v1498
        %v1535 = vunpack.c.l.b16 %v1499
        %v1536 = vunpack.c.l.b16 %v1500
        %v1537 = vunpack.c.l.b16 %v1501
        %v1538 = vunpack.c.l.b16 %v1502
        %v1539 = vunpack.c.l.b16 %v1503
        %v1540 = vunpack.c.l.b16 %v1504
        %v1541 = vunpack.c.l.b16 %v1505
        %v1542 = vunpack.c.l.b16 %v1506
        %v1543 = vunpack.c.l.b16 %v1507
        %v1544 = vunpack.c.l.b16 %v1508
        %v1545 = vunpack.c.l.b16 %v1509
        %v1546 = vunpack.c.l.b16 %v1510
        %v1547 = vunpack.c.l.b16 %v1511
        %v1548 = vpack.c.b16 %v1533, %v1532
        %v1549 = vpack.c.b16 %v1535, %v1534
        %v1550 = vpack.c.b16 %v1537, %v1536
        %v1551 = vpack.c.b16 %v1539, %v1538
        %v1552 = vpack.c.b16 %v1541, %v1540
        %v1553 = vpack.c.b16 %v1543, %v1542
        %v1554 = vpack.c.b16 %v1545, %v1544
        %v1555 = vpack.c.b16 %v1547, %v1546
        %1564 = vmatprep.subr.bf16.mxu0 0
        %1565 = vmatpush1.bf16.msra.mxu0 %v1548
        %1566 = vmatprep.subr.bf16.mxu0 0
        %1567 = vmatpush1.bf16.msra.mxu0 %v1549
        %1568 = vmatprep.subr.bf16.mxu0 0
        %1569 = vmatpush1.bf16.msra.mxu0 %v1550
        %1570 = vmatprep.subr.bf16.mxu0 0
        %1571 = vmatpush1.bf16.msra.mxu0 %v1551
        %1572 = vmatprep.subr.bf16.mxu0 0
        %1573 = vmatpush1.bf16.msra.mxu0 %v1552
        %1574 = vmatprep.subr.bf16.mxu0 0
        %1575 = vmatpush1.bf16.msra.mxu0 %v1553
        %1576 = vmatprep.subr.bf16.mxu0 0
        %1577 = vmatpush1.bf16.msra.mxu0 %v1554
        %1578 = vmatprep.subr.bf16.mxu0 0
        %1579 = vmatpush1.bf16.msra.mxu0 %v1555
        %1580 = vmatprep.subr.bf16.mxu0 0
        %1581 = vmatpush1.bf16.msra.mxu0 0
        %1582 = vmatprep.subr.bf16.mxu0 0
        %1583 = vmatpush1.bf16.msra.mxu0 0
        %1584 = vmatprep.subr.bf16.mxu0 0
        %1585 = vmatpush1.bf16.msra.mxu0 0
        %1586 = vmatprep.subr.bf16.mxu0 0
        %1587 = vmatpush1.bf16.msra.mxu0 0
        %1588 = vmatprep.subr.bf16.mxu0 0
        %1589 = vmatpush1.bf16.msra.mxu0 0
        %1590 = vmatprep.subr.bf16.mxu0 0
        %1591 = vmatpush1.bf16.msra.mxu0 0
        %1592 = vmatprep.subr.bf16.mxu0 0
        %1593 = vmatpush1.bf16.msra.mxu0 0
        %1594 = vmatprep.subr.bf16.mxu0 0
        %1595 = vmatpush1.bf16.msra.mxu0 0
        %1596 = vmatprep.mubr.bf16.mxu0 0
        %1597 = vmatmul.mubr.bf16.gmra.mrb[0].mxu0 %v1480
        %v1598 = vpop.f32.mrb[0].mxu0
        %v1599 = vadd.f32 %v1515, %v1598
        %v1600 = vpop.f32.mrb[0].mxu0
        %v1601 = vpop.f32.mrb[0].mxu0
        %v1602 = vadd.f32 %v1515, %v1601
        %v1603 = vpop.f32.mrb[0].mxu0
        %1604 = vmatprep.mubr.bf16.mxu0 0
        %1605 = vmatmul.mubr.bf16.gmra.mrb[0].mxu0 %v1481
        %v1606 = vpop.f32.mrb[0].mxu0
        %v1607 = vadd.f32 %v1515, %v1606
        %v1608 = vpop.f32.mrb[0].mxu0
        %v1609 = vpop.f32.mrb[0].mxu0
        %v1610 = vadd.f32 %v1515, %v1609
        %v1611 = vpop.f32.mrb[0].mxu0
        %1612 = vmatprep.mubr.bf16.mxu0 0
        %1613 = vmatmul.mubr.bf16.gmra.mrb[0].mxu0 %v1482
        %v1614 = vpop.f32.mrb[0].mxu0
        %v1615 = vadd.f32 %v1515, %v1614
        %v1616 = vpop.f32.mrb[0].mxu0
        %v1617 = vpop.f32.mrb[0].mxu0
        %v1618 = vadd.f32 %v1515, %v1617
        %v1619 = vpop.f32.mrb[0].mxu0
        %1620 = vmatprep.mubr.bf16.mxu0 0
        %1621 = vmatmul.mubr.bf16.gmra.mrb[0].mxu0 %v1483
        %v1622 = vpop.f32.mrb[0].mxu0
        %v1623 = vadd.f32 %v1515, %v1622
        %v1624 = vpop.f32.mrb[0].mxu0
        %v1625 = vpop.f32.mrb[0].mxu0
        %v1626 = vadd.f32 %v1515, %v1625
        %v1627 = vpop.f32.mrb[0].mxu0
        %1628 = vmatprep.mubr.bf16.mxu0 0
        %1629 = vmatmul.mubr.bf16.gmra.mrb[0].mxu0 %v1484
        %v1630 = vpop.f32.mrb[0].mxu0
        %v1631 = vadd.f32 %v1515, %v1630
        %v1632 = vpop.f32.mrb[0].mxu0
        %v1633 = vpop.f32.mrb[0].mxu0
        %v1634 = vadd.f32 %v1515, %v1633
        %v1635 = vpop.f32.mrb[0].mxu0
        %1636 = vmatprep.mubr.bf16.mxu0 0
        %1637 = vmatmul.mubr.bf16.gmra.mrb[0].mxu0 %v1485
        %v1638 = vpop.f32.mrb[0].mxu0
        %v1639 = vadd.f32 %v1515, %v1638
        %v1640 = vpop.f32.mrb[0].mxu0
        %v1641 = vpop.f32.mrb[0].mxu0
        %v1642 = vadd.f32 %v1515, %v1641
        %v1643 = vpop.f32.mrb[0].mxu0
        %1644 = vmatprep.mubr.bf16.mxu0 0
        %1645 = vmatmul.mubr.bf16.gmra.mrb[0].mxu0 %v1486
        %v1646 = vpop.f32.mrb[0].mxu0
        %v1647 = vadd.f32 %v1515, %v1646
        %v1648 = vpop.f32.mrb[0].mxu0
        %v1649 = vpop.f32.mrb[0].mxu0
        %v1650 = vadd.f32 %v1515, %v1649
        %v1651 = vpop.f32.mrb[0].mxu0
        %1652 = vmatprep.mubr.bf16.mxu0 0
        %1653 = vmatmul.mubr.bf16.gmra.mrb[0].mxu0 %v1487
        %v1654 = vpop.f32.mrb[0].mxu0
        %v1655 = vadd.f32 %v1515, %v1654
        %v1656 = vpop.f32.mrb[0].mxu0
        %v1657 = vpop.f32.mrb[0].mxu0
        %v1658 = vadd.f32 %v1515, %v1657
        %v1659 = vpop.f32.mrb[0].mxu0
        %1660 = vmatprep.mubr.bf16.mxu0 0
        %1661 = vmatmul.mubr.bf16.gmra.mrb[0].mxu0 %v1488
        %v1662 = vpop.f32.mrb[0].mxu0
        %v1663 = vadd.f32 %v1515, %v1662
        %v1664 = vpop.f32.mrb[0].mxu0
        %v1665 = vpop.f32.mrb[0].mxu0
        %v1666 = vadd.f32 %v1515, %v1665
        %v1667 = vpop.f32.mrb[0].mxu0
        %1668 = vmatprep.mubr.bf16.mxu0 0
        %1669 = vmatmul.mubr.bf16.gmra.mrb[0].mxu0 %v1489
        %v1670 = vpop.f32.mrb[0].mxu0
        %v1671 = vadd.f32 %v1515, %v1670
        %v1672 = vpop.f32.mrb[0].mxu0
        %v1673 = vpop.f32.mrb[0].mxu0
        %v1674 = vadd.f32 %v1515, %v1673
        %v1675 = vpop.f32.mrb[0].mxu0
        %1676 = vmatprep.mubr.bf16.mxu0 0
        %1677 = vmatmul.mubr.bf16.gmra.mrb[0].mxu0 %v1490
        %v1678 = vpop.f32.mrb[0].mxu0
        %v1679 = vadd.f32 %v1515, %v1678
        %v1680 = vpop.f32.mrb[0].mxu0
        %v1681 = vpop.f32.mrb[0].mxu0
        %v1682 = vadd.f32 %v1515, %v1681
        %v1683 = vpop.f32.mrb[0].mxu0
        %1684 = vmatprep.mubr.bf16.mxu0 0
        %1685 = vmatmul.mubr.bf16.gmra.mrb[0].mxu0 %v1491
        %v1686 = vpop.f32.mrb[0].mxu0
        %v1687 = vadd.f32 %v1515, %v1686
        %v1688 = vpop.f32.mrb[0].mxu0
        %v1689 = vpop.f32.mrb[0].mxu0
        %v1690 = vadd.f32 %v1515, %v1689
        %v1691 = vpop.f32.mrb[0].mxu0
        %1692 = vmatprep.mubr.bf16.mxu0 0
        %1693 = vmatmul.mubr.bf16.gmra.mrb[0].mxu0 %v1492
        %v1694 = vpop.f32.mrb[0].mxu0
        %v1695 = vadd.f32 %v1515, %v1694
        %v1696 = vpop.f32.mrb[0].mxu0
        %v1697 = vpop.f32.mrb[0].mxu0
        %v1698 = vadd.f32 %v1515, %v1697
        %v1699 = vpop.f32.mrb[0].mxu0
        %1700 = vmatprep.mubr.bf16.mxu0 0
        %1701 = vmatmul.mubr.bf16.gmra.mrb[0].mxu0 %v1493
        %v1702 = vpop.f32.mrb[0].mxu0
        %v1703 = vadd.f32 %v1515, %v1702
        %v1704 = vpop.f32.mrb[0].mxu0
        %v1705 = vpop.f32.mrb[0].mxu0
        %v1706 = vadd.f32 %v1515, %v1705
        %v1707 = vpop.f32.mrb[0].mxu0
        %1708 = vmatprep.mubr.bf16.mxu0 0
        %1709 = vmatmul.mubr.bf16.gmra.mrb[0].mxu0 %v1494
        %v1710 = vpop.f32.mrb[0].mxu0
        %v1711 = vadd.f32 %v1515, %v1710
        %v1712 = vpop.f32.mrb[0].mxu0
        %v1713 = vpop.f32.mrb[0].mxu0
        %v1714 = vadd.f32 %v1515, %v1713
        %v1715 = vpop.f32.mrb[0].mxu0
        %1716 = vmatprep.mubr.bf16.mxu0 0
        %1717 = vmatmul.mubr.bf16.gmra.mrb[0].mxu0 %v1495
        %v1718 = vpop.f32.mrb[0].mxu0
        %v1719 = vadd.f32 %v1515, %v1718
        %v1720 = vpop.f32.mrb[0].mxu0
        %v1721 = vpop.f32.mrb[0].mxu0
        %v1722 = vadd.f32 %v1515, %v1721
        %v1723 = vpop.f32.mrb[0].mxu0
        %1724 = vdwg.mxu0
        %v1725 = vadd.f32 %v949, %v1599
        %v1726 = vadd.f32 %v952, %v1602
        %v1727 = vadd.f32 %v957, %v1607
        %v1728 = vadd.f32 %v960, %v1610
        %v1729 = vadd.f32 %v965, %v1615
        %v1730 = vadd.f32 %v968, %v1618
        %v1731 = vadd.f32 %v973, %v1623
        %v1732 = vadd.f32 %v976, %v1626
        %v1733 = vadd.f32 %v981, %v1631
        %v1734 = vadd.f32 %v984, %v1634
        %v1735 = vadd.f32 %v989, %v1639
        %v1736 = vadd.f32 %v992, %v1642
        %v1737 = vadd.f32 %v997, %v1647
        %v1738 = vadd.f32 %v1000, %v1650
        %v1739 = vadd.f32 %v1005, %v1655
        %v1740 = vadd.f32 %v1008, %v1658
        %v1741 = vadd.f32 %v1013, %v1663
        %v1742 = vadd.f32 %v1016, %v1666
        %v1743 = vadd.f32 %v1021, %v1671
        %v1744 = vadd.f32 %v1024, %v1674
        %v1745 = vadd.f32 %v1029, %v1679
        %v1746 = vadd.f32 %v1032, %v1682
        %v1747 = vadd.f32 %v1037, %v1687
        %v1748 = vadd.f32 %v1040, %v1690
        %v1749 = vadd.f32 %v1045, %v1695
        %v1750 = vadd.f32 %v1048, %v1698
        %v1751 = vadd.f32 %v1053, %v1703
        %v1752 = vadd.f32 %v1056, %v1706
        %v1753 = vadd.f32 %v1061, %v1711
        %v1754 = vadd.f32 %v1064, %v1714
        %v1755 = vadd.f32 %v1069, %v1719
        %v1756 = vadd.f32 %v1072, %v1722
        %v1757 = vld [vmem:[%s292] sm:$0xff]
        %v1758 = vld [vmem:[%s292 + $0x8] sm:$0xff]
        %v1759 = vld [vmem:[%s292 + $0x10] sm:$0xff]
        %v1760 = vld [vmem:[%s292 + $0x18] sm:$0xff]
        %v1761 = vld [vmem:[%s292 + $0x20] sm:$0xff]
        %v1762 = vld [vmem:[%s292 + $0x28] sm:$0xff]
        %v1763 = vld [vmem:[%s292 + $0x30] sm:$0xff]
        %v1764 = vld [vmem:[%s292 + $0x38] sm:$0xff]
        %v1765 = vld [vmem:[%s292 + $0x40] sm:$0xff]
        %v1766 = vld [vmem:[%s292 + $0x48] sm:$0xff]
        %v1767 = vld [vmem:[%s292 + $0x50] sm:$0xff]
        %v1768 = vld [vmem:[%s292 + $0x58] sm:$0xff]
        %v1769 = vld [vmem:[%s292 + $0x60] sm:$0xff]
        %v1770 = vld [vmem:[%s292 + $0x68] sm:$0xff]
        %v1771 = vld [vmem:[%s292 + $0x70] sm:$0xff]
        %v1772 = vld [vmem:[%s292 + $0x78] sm:$0xff]
        %v1773 = vld [vmem:[%s292 + $0x80] sm:$0xff]
        %v1774 = vld [vmem:[%s292 + $0x88] sm:$0xff]
        %v1775 = vld [vmem:[%s292 + $0x90] sm:$0xff]
        %v1776 = vld [vmem:[%s292 + $0x98] sm:$0xff]
        %v1777 = vld [vmem:[%s292 + $0xa0] sm:$0xff]
        %v1778 = vld [vmem:[%s292 + $0xa8] sm:$0xff]
        %v1779 = vld [vmem:[%s292 + $0xb0] sm:$0xff]
        %v1780 = vld [vmem:[%s292 + $0xb8] sm:$0xff]
        %v1781 = vld [vmem:[%s292 + $0xc0] sm:$0xff]
        %v1782 = vld [vmem:[%s292 + $0xc8] sm:$0xff]
        %v1783 = vld [vmem:[%s292 + $0xd0] sm:$0xff]
        %v1784 = vld [vmem:[%s292 + $0xd8] sm:$0xff]
        %v1785 = vld [vmem:[%s292 + $0xe0] sm:$0xff]
        %v1786 = vld [vmem:[%s292 + $0xe8] sm:$0xff]
        %v1787 = vld [vmem:[%s292 + $0xf0] sm:$0xff]
        %v1788 = vld [vmem:[%s292 + $0xf8] sm:$0xff]
        %v1789 = vadd.f32 %v1725, %v1757
        %v1790 = vadd.f32 %v1726, %v1758
        %v1791 = vadd.f32 %v1727, %v1759
        %v1792 = vadd.f32 %v1728, %v1760
        %v1793 = vadd.f32 %v1729, %v1761
        %v1794 = vadd.f32 %v1730, %v1762
        %v1795 = vadd.f32 %v1731, %v1763
        %v1796 = vadd.f32 %v1732, %v1764
        %v1797 = vadd.f32 %v1733, %v1765
        %v1798 = vadd.f32 %v1734, %v1766
        %v1799 = vadd.f32 %v1735, %v1767
        %v1800 = vadd.f32 %v1736, %v1768
        %v1801 = vadd.f32 %v1737, %v1769
        %v1802 = vadd.f32 %v1738, %v1770
        %v1803 = vadd.f32 %v1739, %v1771
        %v1804 = vadd.f32 %v1740, %v1772
        %v1805 = vadd.f32 %v1741, %v1773
        %v1806 = vadd.f32 %v1742, %v1774
        %v1807 = vadd.f32 %v1743, %v1775
        %v1808 = vadd.f32 %v1744, %v1776
        %v1809 = vadd.f32 %v1745, %v1777
        %v1810 = vadd.f32 %v1746, %v1778
        %v1811 = vadd.f32 %v1747, %v1779
        %v1812 = vadd.f32 %v1748, %v1780
        %v1813 = vadd.f32 %v1749, %v1781
        %v1814 = vadd.f32 %v1750, %v1782
        %v1815 = vadd.f32 %v1751, %v1783
        %v1816 = vadd.f32 %v1752, %v1784
        %v1817 = vadd.f32 %v1753, %v1785
        %v1818 = vadd.f32 %v1754, %v1786
        %v1819 = vadd.f32 %v1755, %v1787
        %v1820 = vadd.f32 %v1756, %v1788
        %1821 = vadd.xlane.f32.xlu0 %v1789
        %v1822 = vpop.xlane.xlu0 %1821
        %1823 = vadd.xlane.f32.xlu0 %v1790
        %v1824 = vpop.xlane.xlu0 %1823
        %1825 = vadd.xlane.f32.xlu0 %v1791
        %v1826 = vpop.xlane.xlu0 %1825
        %1827 = vadd.xlane.f32.xlu0 %v1792
        %v1828 = vpop.xlane.xlu0 %1827
        %1829 = vadd.xlane.f32.xlu0 %v1793
        %v1830 = vpop.xlane.xlu0 %1829
        %1831 = vadd.xlane.f32.xlu0 %v1794
        %v1832 = vpop.xlane.xlu0 %1831
        %1833 = vadd.xlane.f32.xlu0 %v1795
        %v1834 = vpop.xlane.xlu0 %1833
        %1835 = vadd.xlane.f32.xlu0 %v1796
        %v1836 = vpop.xlane.xlu0 %1835
        %1837 = vadd.xlane.f32.xlu0 %v1797
        %v1838 = vpop.xlane.xlu0 %1837
        %1839 = vadd.xlane.f32.xlu0 %v1798
        %v1840 = vpop.xlane.xlu0 %1839
        %1841 = vadd.xlane.f32.xlu0 %v1799
        %v1842 = vpop.xlane.xlu0 %1841
        %1843 = vadd.xlane.f32.xlu0 %v1800
        %v1844 = vpop.xlane.xlu0 %1843
        %1845 = vadd.xlane.f32.xlu0 %v1801
        %v1846 = vpop.xlane.xlu0 %1845
        %1847 = vadd.xlane.f32.xlu0 %v1802
        %v1848 = vpop.xlane.xlu0 %1847
        %1849 = vadd.xlane.f32.xlu0 %v1803
        %v1850 = vpop.xlane.xlu0 %1849
        %1851 = vadd.xlane.f32.xlu0 %v1804
        %v1852 = vpop.xlane.xlu0 %1851
        %1853 = vadd.xlane.f32.xlu0 %v1805
        %v1854 = vpop.xlane.xlu0 %1853
        %1855 = vadd.xlane.f32.xlu0 %v1806
        %v1856 = vpop.xlane.xlu0 %1855
        %1857 = vadd.xlane.f32.xlu0 %v1807
        %v1858 = vpop.xlane.xlu0 %1857
        %1859 = vadd.xlane.f32.xlu0 %v1808
        %v1860 = vpop.xlane.xlu0 %1859
        %1861 = vadd.xlane.f32.xlu0 %v1809
        %v1862 = vpop.xlane.xlu0 %1861
        %1863 = vadd.xlane.f32.xlu0 %v1810
        %v1864 = vpop.xlane.xlu0 %1863
        %1865 = vadd.xlane.f32.xlu0 %v1811
        %v1866 = vpop.xlane.xlu0 %1865
        %1867 = vadd.xlane.f32.xlu0 %v1812
        %v1868 = vpop.xlane.xlu0 %1867
        %1869 = vadd.xlane.f32.xlu0 %v1813
        %v1870 = vpop.xlane.xlu0 %1869
        %1871 = vadd.xlane.f32.xlu0 %v1814
        %v1872 = vpop.xlane.xlu0 %1871
        %1873 = vadd.xlane.f32.xlu0 %v1815
        %v1874 = vpop.xlane.xlu0 %1873
        %1875 = vadd.xlane.f32.xlu0 %v1816
        %v1876 = vpop.xlane.xlu0 %1875
        %1877 = vadd.xlane.f32.xlu0 %v1817
        %v1878 = vpop.xlane.xlu0 %1877
        %1879 = vadd.xlane.f32.xlu0 %v1818
        %v1880 = vpop.xlane.xlu0 %1879
        %1881 = vadd.xlane.f32.xlu0 %v1819
        %v1882 = vpop.xlane.xlu0 %1881
        %1883 = vadd.xlane.f32.xlu0 %v1820
        %v1884 = vpop.xlane.xlu0 %1883
        %v1885 = vmul.f32 %v1822, 0.0078125
        %v1886 = vmul.f32 %v1824, 0.0078125
        %v1887 = vmul.f32 %v1826, 0.0078125
        %v1888 = vmul.f32 %v1828, 0.0078125
        %v1889 = vmul.f32 %v1830, 0.0078125
        %v1890 = vmul.f32 %v1832, 0.0078125
        %v1891 = vmul.f32 %v1834, 0.0078125
        %v1892 = vmul.f32 %v1836, 0.0078125
        %v1893 = vmul.f32 %v1838, 0.0078125
        %v1894 = vmul.f32 %v1840, 0.0078125
        %v1895 = vmul.f32 %v1842, 0.0078125
        %v1896 = vmul.f32 %v1844, 0.0078125
        %v1897 = vmul.f32 %v1846, 0.0078125
        %v1898 = vmul.f32 %v1848, 0.0078125
        %v1899 = vmul.f32 %v1850, 0.0078125
        %v1900 = vmul.f32 %v1852, 0.0078125
        %v1901 = vmul.f32 %v1854, 0.0078125
        %v1902 = vmul.f32 %v1856, 0.0078125
        %v1903 = vmul.f32 %v1858, 0.0078125
        %v1904 = vmul.f32 %v1860, 0.0078125
        %v1905 = vmul.f32 %v1862, 0.0078125
        %v1906 = vmul.f32 %v1864, 0.0078125
        %v1907 = vmul.f32 %v1866, 0.0078125
        %v1908 = vmul.f32 %v1868, 0.0078125
        %v1909 = vmul.f32 %v1870, 0.0078125
        %v1910 = vmul.f32 %v1872, 0.0078125
        %v1911 = vmul.f32 %v1874, 0.0078125
        %v1912 = vmul.f32 %v1876, 0.0078125
        %v1913 = vmul.f32 %v1878, 0.0078125
        %v1914 = vmul.f32 %v1880, 0.0078125
        %v1915 = vmul.f32 %v1882, 0.0078125
        %v1916 = vmul.f32 %v1884, 0.0078125
        %v1917 = vmul.f32 %v1789, %v1789
        %v1918 = vmul.f32 %v1790, %v1790
        %v1919 = vmul.f32 %v1791, %v1791
        %v1920 = vmul.f32 %v1792, %v1792
        %v1921 = vmul.f32 %v1793, %v1793
        %v1922 = vmul.f32 %v1794, %v1794
        %v1923 = vmul.f32 %v1795, %v1795
        %v1924 = vmul.f32 %v1796, %v1796
        %v1925 = vmul.f32 %v1797, %v1797
        %v1926 = vmul.f32 %v1798, %v1798
        %v1927 = vmul.f32 %v1799, %v1799
        %v1928 = vmul.f32 %v1800, %v1800
        %v1929 = vmul.f32 %v1801, %v1801
        %v1930 = vmul.f32 %v1802, %v1802
        %v1931 = vmul.f32 %v1803, %v1803
        %v1932 = vmul.f32 %v1804, %v1804
        %v1933 = vmul.f32 %v1805, %v1805
        %v1934 = vmul.f32 %v1806, %v1806
        %v1935 = vmul.f32 %v1807, %v1807
        %v1936 = vmul.f32 %v1808, %v1808
        %v1937 = vmul.f32 %v1809, %v1809
        %v1938 = vmul.f32 %v1810, %v1810
        %v1939 = vmul.f32 %v1811, %v1811
        %v1940 = vmul.f32 %v1812, %v1812
        %v1941 = vmul.f32 %v1813, %v1813
        %v1942 = vmul.f32 %v1814, %v1814
        %v1943 = vmul.f32 %v1815, %v1815
        %v1944 = vmul.f32 %v1816, %v1816
        %v1945 = vmul.f32 %v1817, %v1817
        %v1946 = vmul.f32 %v1818, %v1818
        %v1947 = vmul.f32 %v1819, %v1819
        %v1948 = vmul.f32 %v1820, %v1820
        %1949 = vadd.xlane.f32.xlu0 %v1917
        %v1950 = vpop.xlane.xlu0 %1949
        %1951 = vadd.xlane.f32.xlu0 %v1918
        %v1952 = vpop.xlane.xlu0 %1951
        %1953 = vadd.xlane.f32.xlu0 %v1919
        %v1954 = vpop.xlane.xlu0 %1953
        %1955 = vadd.xlane.f32.xlu0 %v1920
        %v1956 = vpop.xlane.xlu0 %1955
        %1957 = vadd.xlane.f32.xlu0 %v1921
        %v1958 = vpop.xlane.xlu0 %1957
        %1959 = vadd.xlane.f32.xlu0 %v1922
        %v1960 = vpop.xlane.xlu0 %1959
        %1961 = vadd.xlane.f32.xlu0 %v1923
        %v1962 = vpop.xlane.xlu0 %1961
        %1963 = vadd.xlane.f32.xlu0 %v1924
        %v1964 = vpop.xlane.xlu0 %1963
        %1965 = vadd.xlane.f32.xlu0 %v1925
        %v1966 = vpop.xlane.xlu0 %1965
        %1967 = vadd.xlane.f32.xlu0 %v1926
        %v1968 = vpop.xlane.xlu0 %1967
        %1969 = vadd.xlane.f32.xlu0 %v1927
        %v1970 = vpop.xlane.xlu0 %1969
        %1971 = vadd.xlane.f32.xlu0 %v1928
        %v1972 = vpop.xlane.xlu0 %1971
        %1973 = vadd.xlane.f32.xlu0 %v1929
        %v1974 = vpop.xlane.xlu0 %1973
        %1975 = vadd.xlane.f32.xlu0 %v1930
        %v1976 = vpop.xlane.xlu0 %1975
        %1977 = vadd.xlane.f32.xlu0 %v1931
        %v1978 = vpop.xlane.xlu0 %1977
        %1979 = vadd.xlane.f32.xlu0 %v1932
        %v1980 = vpop.xlane.xlu0 %1979
        %1981 = vadd.xlane.f32.xlu0 %v1933
        %v1982 = vpop.xlane.xlu0 %1981
        %1983 = vadd.xlane.f32.xlu0 %v1934
        %v1984 = vpop.xlane.xlu0 %1983
        %1985 = vadd.xlane.f32.xlu0 %v1935
        %v1986 = vpop.xlane.xlu0 %1985
        %1987 = vadd.xlane.f32.xlu0 %v1936
        %v1988 = vpop.xlane.xlu0 %1987
        %1989 = vadd.xlane.f32.xlu0 %v1937
        %v1990 = vpop.xlane.xlu0 %1989
        %1991 = vadd.xlane.f32.xlu0 %v1938
        %v1992 = vpop.xlane.xlu0 %1991
        %1993 = vadd.xlane.f32.xlu0 %v1939
        %v1994 = vpop.xlane.xlu0 %1993
        %1995 = vadd.xlane.f32.xlu0 %v1940
        %v1996 = vpop.xlane.xlu0 %1995
        %1997 = vadd.xlane.f32.xlu0 %v1941
        %v1998 = vpop.xlane.xlu0 %1997
        %1999 = vadd.xlane.f32.xlu0 %v1942
        %v2000 = vpop.xlane.xlu0 %1999
        %2001 = vadd.xlane.f32.xlu0 %v1943
        %v2002 = vpop.xlane.xlu0 %2001
        %2003 = vadd.xlane.f32.xlu0 %v1944
        %v2004 = vpop.xlane.xlu0 %2003
        %2005 = vadd.xlane.f32.xlu0 %v1945
        %v2006 = vpop.xlane.xlu0 %2005
        %2007 = vadd.xlane.f32.xlu0 %v1946
        %v2008 = vpop.xlane.xlu0 %2007
        %2009 = vadd.xlane.f32.xlu0 %v1947
        %v2010 = vpop.xlane.xlu0 %2009
        %2011 = vadd.xlane.f32.xlu0 %v1948
        %v2012 = vpop.xlane.xlu0 %2011
        %v2013 = vmul.f32 %v1950, 0.0078125
        %v2014 = vmul.f32 %v1952, 0.0078125
        %v2015 = vmul.f32 %v1954, 0.0078125
        %v2016 = vmul.f32 %v1956, 0.0078125
        %v2017 = vmul.f32 %v1958, 0.0078125
        %v2018 = vmul.f32 %v1960, 0.0078125
        %v2019 = vmul.f32 %v1962, 0.0078125
        %v2020 = vmul.f32 %v1964, 0.0078125
        %v2021 = vmul.f32 %v1966, 0.0078125
        %v2022 = vmul.f32 %v1968, 0.0078125
        %v2023 = vmul.f32 %v1970, 0.0078125
        %v2024 = vmul.f32 %v1972, 0.0078125
        %v2025 = vmul.f32 %v1974, 0.0078125
        %v2026 = vmul.f32 %v1976, 0.0078125
        %v2027 = vmul.f32 %v1978, 0.0078125
        %v2028 = vmul.f32 %v1980, 0.0078125
        %v2029 = vmul.f32 %v1982, 0.0078125
        %v2030 = vmul.f32 %v1984, 0.0078125
        %v2031 = vmul.f32 %v1986, 0.0078125
        %v2032 = vmul.f32 %v1988, 0.0078125
        %v2033 = vmul.f32 %v1990, 0.0078125
        %v2034 = vmul.f32 %v1992, 0.0078125
        %v2035 = vmul.f32 %v1994, 0.0078125
        %v2036 = vmul.f32 %v1996, 0.0078125
        %v2037 = vmul.f32 %v1998, 0.0078125
        %v2038 = vmul.f32 %v2000, 0.0078125
        %v2039 = vmul.f32 %v2002, 0.0078125
        %v2040 = vmul.f32 %v2004, 0.0078125
        %v2041 = vmul.f32 %v2006, 0.0078125
        %v2042 = vmul.f32 %v2008, 0.0078125
        %v2043 = vmul.f32 %v2010, 0.0078125
        %v2044 = vmul.f32 %v2012, 0.0078125
        %v2045 = vmul.f32 %v1885, %v1885
        %v2046 = vmul.f32 %v1886, %v1886
        %v2047 = vmul.f32 %v1887, %v1887
        %v2048 = vmul.f32 %v1888, %v1888
        %v2049 = vmul.f32 %v1889, %v1889
        %v2050 = vmul.f32 %v1890, %v1890
        %v2051 = vmul.f32 %v1891, %v1891
        %v2052 = vmul.f32 %v1892, %v1892
        %v2053 = vmul.f32 %v1893, %v1893
        %v2054 = vmul.f32 %v1894, %v1894
        %v2055 = vmul.f32 %v1895, %v1895
        %v2056 = vmul.f32 %v1896, %v1896
        %v2057 = vmul.f32 %v1897, %v1897
        %v2058 = vmul.f32 %v1898, %v1898
        %v2059 = vmul.f32 %v1899, %v1899
        %v2060 = vmul.f32 %v1900, %v1900
        %v2061 = vmul.f32 %v1901, %v1901
        %v2062 = vmul.f32 %v1902, %v1902
        %v2063 = vmul.f32 %v1903, %v1903
        %v2064 = vmul.f32 %v1904, %v1904
        %v2065 = vmul.f32 %v1905, %v1905
        %v2066 = vmul.f32 %v1906, %v1906
        %v2067 = vmul.f32 %v1907, %v1907
        %v2068 = vmul.f32 %v1908, %v1908
        %v2069 = vmul.f32 %v1909, %v1909
        %v2070 = vmul.f32 %v1910, %v1910
        %v2071 = vmul.f32 %v1911, %v1911
        %v2072 = vmul.f32 %v1912, %v1912
        %v2073 = vmul.f32 %v1913, %v1913
        %v2074 = vmul.f32 %v1914, %v1914
        %v2075 = vmul.f32 %v1915, %v1915
        %v2076 = vmul.f32 %v1916, %v1916
        %v2077 = vsub.f32 %v2013, %v2045
        %v2078 = vsub.f32 %v2014, %v2046
        %v2079 = vsub.f32 %v2015, %v2047
        %v2080 = vsub.f32 %v2016, %v2048
        %v2081 = vsub.f32 %v2017, %v2049
        %v2082 = vsub.f32 %v2018, %v2050
        %v2083 = vsub.f32 %v2019, %v2051
        %v2084 = vsub.f32 %v2020, %v2052
        %v2085 = vsub.f32 %v2021, %v2053
        %v2086 = vsub.f32 %v2022, %v2054
        %v2087 = vsub.f32 %v2023, %v2055
        %v2088 = vsub.f32 %v2024, %v2056
        %v2089 = vsub.f32 %v2025, %v2057
        %v2090 = vsub.f32 %v2026, %v2058
        %v2091 = vsub.f32 %v2027, %v2059
        %v2092 = vsub.f32 %v2028, %v2060
        %v2093 = vsub.f32 %v2029, %v2061
        %v2094 = vsub.f32 %v2030, %v2062
        %v2095 = vsub.f32 %v2031, %v2063
        %v2096 = vsub.f32 %v2032, %v2064
        %v2097 = vsub.f32 %v2033, %v2065
        %v2098 = vsub.f32 %v2034, %v2066
        %v2099 = vsub.f32 %v2035, %v2067
        %v2100 = vsub.f32 %v2036, %v2068
        %v2101 = vsub.f32 %v2037, %v2069
        %v2102 = vsub.f32 %v2038, %v2070
        %v2103 = vsub.f32 %v2039, %v2071
        %v2104 = vsub.f32 %v2040, %v2072
        %v2105 = vsub.f32 %v2041, %v2073
        %v2106 = vsub.f32 %v2042, %v2074
        %v2107 = vsub.f32 %v2043, %v2075
        %v2108 = vsub.f32 %v2044, %v2076
        %v2109 = vmax.f32 %v2077, 0.0
        %v2110 = vmax.f32 %v2078, 0.0
        %v2111 = vmax.f32 %v2079, 0.0
        %v2112 = vmax.f32 %v2080, 0.0
        %v2113 = vmax.f32 %v2081, 0.0
        %v2114 = vmax.f32 %v2082, 0.0
        %v2115 = vmax.f32 %v2083, 0.0
        %v2116 = vmax.f32 %v2084, 0.0
        %v2117 = vmax.f32 %v2085, 0.0
        %v2118 = vmax.f32 %v2086, 0.0
        %v2119 = vmax.f32 %v2087, 0.0
        %v2120 = vmax.f32 %v2088, 0.0
        %v2121 = vmax.f32 %v2089, 0.0
        %v2122 = vmax.f32 %v2090, 0.0
        %v2123 = vmax.f32 %v2091, 0.0
        %v2124 = vmax.f32 %v2092, 0.0
        %v2125 = vmax.f32 %v2093, 0.0
        %v2126 = vmax.f32 %v2094, 0.0
        %v2127 = vmax.f32 %v2095, 0.0
        %v2128 = vmax.f32 %v2096, 0.0
        %v2129 = vmax.f32 %v2097, 0.0
        %v2130 = vmax.f32 %v2098, 0.0
        %v2131 = vmax.f32 %v2099, 0.0
        %v2132 = vmax.f32 %v2100, 0.0
        %v2133 = vmax.f32 %v2101, 0.0
        %v2134 = vmax.f32 %v2102, 0.0
        %v2135 = vmax.f32 %v2103, 0.0
        %v2136 = vmax.f32 %v2104, 0.0
        %v2137 = vmax.f32 %v2105, 0.0
        %v2138 = vmax.f32 %v2106, 0.0
        %v2139 = vmax.f32 %v2107, 0.0
        %v2140 = vmax.f32 %v2108, 0.0
        %v2141 = vadd.f32 %v2109, 1e-12
        %v2142 = vadd.f32 %v2110, 1e-12
        %v2143 = vadd.f32 %v2111, 1e-12
        %v2144 = vadd.f32 %v2112, 1e-12
        %v2145 = vadd.f32 %v2113, 1e-12
        %v2146 = vadd.f32 %v2114, 1e-12
        %v2147 = vadd.f32 %v2115, 1e-12
        %v2148 = vadd.f32 %v2116, 1e-12
        %v2149 = vadd.f32 %v2117, 1e-12
        %v2150 = vadd.f32 %v2118, 1e-12
        %v2151 = vadd.f32 %v2119, 1e-12
        %v2152 = vadd.f32 %v2120, 1e-12
        %v2153 = vadd.f32 %v2121, 1e-12
        %v2154 = vadd.f32 %v2122, 1e-12
        %v2155 = vadd.f32 %v2123, 1e-12
        %v2156 = vadd.f32 %v2124, 1e-12
        %v2157 = vadd.f32 %v2125, 1e-12
        %v2158 = vadd.f32 %v2126, 1e-12
        %v2159 = vadd.f32 %v2127, 1e-12
        %v2160 = vadd.f32 %v2128, 1e-12
        %v2161 = vadd.f32 %v2129, 1e-12
        %v2162 = vadd.f32 %v2130, 1e-12
        %v2163 = vadd.f32 %v2131, 1e-12
        %v2164 = vadd.f32 %v2132, 1e-12
        %v2165 = vadd.f32 %v2133, 1e-12
        %v2166 = vadd.f32 %v2134, 1e-12
        %v2167 = vadd.f32 %v2135, 1e-12
        %v2168 = vadd.f32 %v2136, 1e-12
        %v2169 = vadd.f32 %v2137, 1e-12
        %v2170 = vadd.f32 %v2138, 1e-12
        %v2171 = vadd.f32 %v2139, 1e-12
        %v2172 = vadd.f32 %v2140, 1e-12
        %v2173 = vrsqrt.pop %v2141
        %v2174 = vrsqrt.pop %v2142
        %v2175 = vrsqrt.pop %v2143
        %v2176 = vrsqrt.pop %v2144
        %v2177 = vrsqrt.pop %v2145
        %v2178 = vrsqrt.pop %v2146
        %v2179 = vrsqrt.pop %v2147
        %v2180 = vrsqrt.pop %v2148
        %v2181 = vrsqrt.pop %v2149
        %v2182 = vrsqrt.pop %v2150
        %v2183 = vrsqrt.pop %v2151
        %v2184 = vrsqrt.pop %v2152
        %v2185 = vrsqrt.pop %v2153
        %v2186 = vrsqrt.pop %v2154
        %v2187 = vrsqrt.pop %v2155
        %v2188 = vrsqrt.pop %v2156
        %v2189 = vrsqrt.pop %v2157
        %v2190 = vrsqrt.pop %v2158
        %v2191 = vrsqrt.pop %v2159
        %v2192 = vrsqrt.pop %v2160
        %v2193 = vrsqrt.pop %v2161
        %v2194 = vrsqrt.pop %v2162
        %v2195 = vrsqrt.pop %v2163
        %v2196 = vrsqrt.pop %v2164
        %v2197 = vrsqrt.pop %v2165
        %v2198 = vrsqrt.pop %v2166
        %v2199 = vrsqrt.pop %v2167
        %v2200 = vrsqrt.pop %v2168
        %v2201 = vrsqrt.pop %v2169
        %v2202 = vrsqrt.pop %v2170
        %v2203 = vrsqrt.pop %v2171
        %v2204 = vrsqrt.pop %v2172
        %v2205 = vlaneseq
        %v2206 = vshrl.u32 %v2205, 7
        %v2207 = vsub.s32 0, %v2206
        %v2208 = vrot.slane %v298, %v2207
        %v2209 = vmul.f32 %v2208, %v2173
        %v2210 = vmul.f32 %v2208, %v2174
        %v2211 = vmul.f32 %v2208, %v2175
        %v2212 = vmul.f32 %v2208, %v2176
        %v2213 = vmul.f32 %v2208, %v2177
        %v2214 = vmul.f32 %v2208, %v2178
        %v2215 = vmul.f32 %v2208, %v2179
        %v2216 = vmul.f32 %v2208, %v2180
        %v2217 = vmul.f32 %v2208, %v2181
        %v2218 = vmul.f32 %v2208, %v2182
        %v2219 = vmul.f32 %v2208, %v2183
        %v2220 = vmul.f32 %v2208, %v2184
        %v2221 = vmul.f32 %v2208, %v2185
        %v2222 = vmul.f32 %v2208, %v2186
        %v2223 = vmul.f32 %v2208, %v2187
        %v2224 = vmul.f32 %v2208, %v2188
        %v2225 = vmul.f32 %v2208, %v2189
        %v2226 = vmul.f32 %v2208, %v2190
        %v2227 = vmul.f32 %v2208, %v2191
        %v2228 = vmul.f32 %v2208, %v2192
        %v2229 = vmul.f32 %v2208, %v2193
        %v2230 = vmul.f32 %v2208, %v2194
        %v2231 = vmul.f32 %v2208, %v2195
        %v2232 = vmul.f32 %v2208, %v2196
        %v2233 = vmul.f32 %v2208, %v2197
        %v2234 = vmul.f32 %v2208, %v2198
        %v2235 = vmul.f32 %v2208, %v2199
        %v2236 = vmul.f32 %v2208, %v2200
        %v2237 = vmul.f32 %v2208, %v2201
        %v2238 = vmul.f32 %v2208, %v2202
        %v2239 = vmul.f32 %v2208, %v2203
        %v2240 = vmul.f32 %v2208, %v2204
        %v2241 = vmul.f32 %v1789, %v2209
        %v2242 = vmul.f32 %v1790, %v2210
        %v2243 = vmul.f32 %v1791, %v2211
        %v2244 = vmul.f32 %v1792, %v2212
        %v2245 = vmul.f32 %v1793, %v2213
        %v2246 = vmul.f32 %v1794, %v2214
        %v2247 = vmul.f32 %v1795, %v2215
        %v2248 = vmul.f32 %v1796, %v2216
        %v2249 = vmul.f32 %v1797, %v2217
        %v2250 = vmul.f32 %v1798, %v2218
        %v2251 = vmul.f32 %v1799, %v2219
        %v2252 = vmul.f32 %v1800, %v2220
        %v2253 = vmul.f32 %v1801, %v2221
        %v2254 = vmul.f32 %v1802, %v2222
        %v2255 = vmul.f32 %v1803, %v2223
        %v2256 = vmul.f32 %v1804, %v2224
        %v2257 = vmul.f32 %v1805, %v2225
        %v2258 = vmul.f32 %v1806, %v2226
        %v2259 = vmul.f32 %v1807, %v2227
        %v2260 = vmul.f32 %v1808, %v2228
        %v2261 = vmul.f32 %v1809, %v2229
        %v2262 = vmul.f32 %v1810, %v2230
        %v2263 = vmul.f32 %v1811, %v2231
        %v2264 = vmul.f32 %v1812, %v2232
        %v2265 = vmul.f32 %v1813, %v2233
        %v2266 = vmul.f32 %v1814, %v2234
        %v2267 = vmul.f32 %v1815, %v2235
        %v2268 = vmul.f32 %v1816, %v2236
        %v2269 = vmul.f32 %v1817, %v2237
        %v2270 = vmul.f32 %v1818, %v2238
        %v2271 = vmul.f32 %v1819, %v2239
        %v2272 = vmul.f32 %v1820, %v2240
        %v2273 = vmul.f32 %v1885, %v2209
        %v2274 = vmul.f32 %v1886, %v2210
        %v2275 = vmul.f32 %v1887, %v2211
        %v2276 = vmul.f32 %v1888, %v2212
        %v2277 = vmul.f32 %v1889, %v2213
        %v2278 = vmul.f32 %v1890, %v2214
        %v2279 = vmul.f32 %v1891, %v2215
        %v2280 = vmul.f32 %v1892, %v2216
        %v2281 = vmul.f32 %v1893, %v2217
        %v2282 = vmul.f32 %v1894, %v2218
        %v2283 = vmul.f32 %v1895, %v2219
        %v2284 = vmul.f32 %v1896, %v2220
        %v2285 = vmul.f32 %v1897, %v2221
        %v2286 = vmul.f32 %v1898, %v2222
        %v2287 = vmul.f32 %v1899, %v2223
        %v2288 = vmul.f32 %v1900, %v2224
        %v2289 = vmul.f32 %v1901, %v2225
        %v2290 = vmul.f32 %v1902, %v2226
        %v2291 = vmul.f32 %v1903, %v2227
        %v2292 = vmul.f32 %v1904, %v2228
        %v2293 = vmul.f32 %v1905, %v2229
        %v2294 = vmul.f32 %v1906, %v2230
        %v2295 = vmul.f32 %v1907, %v2231
        %v2296 = vmul.f32 %v1908, %v2232
        %v2297 = vmul.f32 %v1909, %v2233
        %v2298 = vmul.f32 %v1910, %v2234
        %v2299 = vmul.f32 %v1911, %v2235
        %v2300 = vmul.f32 %v1912, %v2236
        %v2301 = vmul.f32 %v1913, %v2237
        %v2302 = vmul.f32 %v1914, %v2238
        %v2303 = vmul.f32 %v1915, %v2239
        %v2304 = vmul.f32 %v1916, %v2240
        %v2305 = vlaneseq
        %v2306 = vshrl.u32 %v2305, 7
        %v2307 = vsub.s32 0, %v2306
        %v2308 = vrot.slane %v299, %v2307
        %v2309 = vsub.f32 %v2308, %v2273
        %v2310 = vsub.f32 %v2308, %v2274
        %v2311 = vsub.f32 %v2308, %v2275
        %v2312 = vsub.f32 %v2308, %v2276
        %v2313 = vsub.f32 %v2308, %v2277
        %v2314 = vsub.f32 %v2308, %v2278
        %v2315 = vsub.f32 %v2308, %v2279
        %v2316 = vsub.f32 %v2308, %v2280
        %v2317 = vsub.f32 %v2308, %v2281
        %v2318 = vsub.f32 %v2308, %v2282
        %v2319 = vsub.f32 %v2308, %v2283
        %v2320 = vsub.f32 %v2308, %v2284
        %v2321 = vsub.f32 %v2308, %v2285
        %v2322 = vsub.f32 %v2308, %v2286
        %v2323 = vsub.f32 %v2308, %v2287
        %v2324 = vsub.f32 %v2308, %v2288
        %v2325 = vsub.f32 %v2308, %v2289
        %v2326 = vsub.f32 %v2308, %v2290
        %v2327 = vsub.f32 %v2308, %v2291
        %v2328 = vsub.f32 %v2308, %v2292
        %v2329 = vsub.f32 %v2308, %v2293
        %v2330 = vsub.f32 %v2308, %v2294
        %v2331 = vsub.f32 %v2308, %v2295
        %v2332 = vsub.f32 %v2308, %v2296
        %v2333 = vsub.f32 %v2308, %v2297
        %v2334 = vsub.f32 %v2308, %v2298
        %v2335 = vsub.f32 %v2308, %v2299
        %v2336 = vsub.f32 %v2308, %v2300
        %v2337 = vsub.f32 %v2308, %v2301
        %v2338 = vsub.f32 %v2308, %v2302
        %v2339 = vsub.f32 %v2308, %v2303
        %v2340 = vsub.f32 %v2308, %v2304
        %v2341 = vadd.f32 %v2241, %v2309
        %v2342 = vadd.f32 %v2242, %v2310
        %v2343 = vadd.f32 %v2243, %v2311
        %v2344 = vadd.f32 %v2244, %v2312
        %v2345 = vadd.f32 %v2245, %v2313
        %v2346 = vadd.f32 %v2246, %v2314
        %v2347 = vadd.f32 %v2247, %v2315
        %v2348 = vadd.f32 %v2248, %v2316
        %v2349 = vadd.f32 %v2249, %v2317
        %v2350 = vadd.f32 %v2250, %v2318
        %v2351 = vadd.f32 %v2251, %v2319
        %v2352 = vadd.f32 %v2252, %v2320
        %v2353 = vadd.f32 %v2253, %v2321
        %v2354 = vadd.f32 %v2254, %v2322
        %v2355 = vadd.f32 %v2255, %v2323
        %v2356 = vadd.f32 %v2256, %v2324
        %v2357 = vadd.f32 %v2257, %v2325
        %v2358 = vadd.f32 %v2258, %v2326
        %v2359 = vadd.f32 %v2259, %v2327
        %v2360 = vadd.f32 %v2260, %v2328
        %v2361 = vadd.f32 %v2261, %v2329
        %v2362 = vadd.f32 %v2262, %v2330
        %v2363 = vadd.f32 %v2263, %v2331
        %v2364 = vadd.f32 %v2264, %v2332
        %v2365 = vadd.f32 %v2265, %v2333
        %v2366 = vadd.f32 %v2266, %v2334
        %v2367 = vadd.f32 %v2267, %v2335
        %v2368 = vadd.f32 %v2268, %v2336
        %v2369 = vadd.f32 %v2269, %v2337
        %v2370 = vadd.f32 %v2270, %v2338
        %v2371 = vadd.f32 %v2271, %v2339
        %v2372 = vadd.f32 %v2272, %v2340
        %2373 = vst [vmem:[%s286] sm:$0xff] %v2341
        %2374 = vst [vmem:[%s286 + $0x8] sm:$0xff] %v2342
        %2375 = vst [vmem:[%s286 + $0x10] sm:$0xff] %v2343
        %2376 = vst [vmem:[%s286 + $0x18] sm:$0xff] %v2344
        %2377 = vst [vmem:[%s286 + $0x20] sm:$0xff] %v2345
        %2378 = vst [vmem:[%s286 + $0x28] sm:$0xff] %v2346
        %2379 = vst [vmem:[%s286 + $0x30] sm:$0xff] %v2347
        %2380 = vst [vmem:[%s286 + $0x38] sm:$0xff] %v2348
        %2381 = vst [vmem:[%s286 + $0x40] sm:$0xff] %v2349
        %2382 = vst [vmem:[%s286 + $0x48] sm:$0xff] %v2350
        %2383 = vst [vmem:[%s286 + $0x50] sm:$0xff] %v2351
        %2384 = vst [vmem:[%s286 + $0x58] sm:$0xff] %v2352
        %2385 = vst [vmem:[%s286 + $0x60] sm:$0xff] %v2353
        %2386 = vst [vmem:[%s286 + $0x68] sm:$0xff] %v2354
        %2387 = vst [vmem:[%s286 + $0x70] sm:$0xff] %v2355
        %2388 = vst [vmem:[%s286 + $0x78] sm:$0xff] %v2356
        %2389 = vst [vmem:[%s286 + $0x80] sm:$0xff] %v2357
        %2390 = vst [vmem:[%s286 + $0x88] sm:$0xff] %v2358
        %2391 = vst [vmem:[%s286 + $0x90] sm:$0xff] %v2359
        %2392 = vst [vmem:[%s286 + $0x98] sm:$0xff] %v2360
        %2393 = vst [vmem:[%s286 + $0xa0] sm:$0xff] %v2361
        %2394 = vst [vmem:[%s286 + $0xa8] sm:$0xff] %v2362
        %2395 = vst [vmem:[%s286 + $0xb0] sm:$0xff] %v2363
        %2396 = vst [vmem:[%s286 + $0xb8] sm:$0xff] %v2364
        %2397 = vst [vmem:[%s286 + $0xc0] sm:$0xff] %v2365
        %2398 = vst [vmem:[%s286 + $0xc8] sm:$0xff] %v2366
        %2399 = vst [vmem:[%s286 + $0xd0] sm:$0xff] %v2367
        %2400 = vst [vmem:[%s286 + $0xd8] sm:$0xff] %v2368
        %2401 = vst [vmem:[%s286 + $0xe0] sm:$0xff] %v2369
        %2402 = vst [vmem:[%s286 + $0xe8] sm:$0xff] %v2370
        %2403 = vst [vmem:[%s286 + $0xf0] sm:$0xff] %v2371
        %2404 = vst [vmem:[%s286 + $0xf8] sm:$0xff] %v2372
        %s2405 = sand.u32 %s167, 1
        %s2406 = scalar_lea.sflag [#allocation4], %s2405
        %s2407 = sand.u32 %s167, 1
        %s2408 = smul.addr %s2407, 256
        %s2409 = scalar_lea.vmem [#allocation5], %s2408
        // Predicated region
        $region49: #{bert_adapted_output.1} parent=43 // pred_check
          %p2410 = pneg %p177
        $region50: #{bert_adapted_output.1} parent=43 // pred_check_branch
          %2412 = sbr.rel (%p2410) target = $region52
        $region51: #{bert_adapted_output.1} parent=43 // pred_region
          %s2413 = smul.u32 32, %s23
          %s2415 = ssub.s32 4096, 4096
          %2416 = vsyncadd %s2406, %s2415
          %s2417 = smul.addr %s2413, 128
          %s2418 = scalar_lea.hbm %s6, %s2417
          %s2419 = sshll.u32 %s2409, 4
          %s2420 = int_to_ptr.vmem [resolvable:$true] %s2419
          %2425 = dma.vmem_to_hbm [thread:$0]  %s2420, 4096, %s2418, %s2406, 128, 128, 8
        $region52: #{bert_adapted_output.1} parent=43 // pred_fallthru
          _
      $region44: #{bert_adapted_output.1} parent=5 // pred_fallthru
        _
      %p2426 = scmp.le.s32.totalorder 2, %s18
      // Predicated region
      $region53: #{bert_adapted_output.1} parent=5 // pred_check
        %p2427 = pneg %p2426
      $region54: #{bert_adapted_output.1} parent=5 // pred_check_branch
        %2429 = sbr.rel (%p2427) target = $region56
      $region55: #{bert_adapted_output.1} parent=5 // pred_region
        %s2430 = ssub.s32 %s18, 2
        // Predicated region
        $region57: #{bert_adapted_output.1} parent=55 // pred_check
          %p2431 = pneg %p183
        $region58: #{bert_adapted_output.1} parent=55 // pred_check_branch
          %2433 = sbr.rel (%p2431) target = $region60
        $region59: #{bert_adapted_output.1} parent=55 // pred_region
          %s2434 = sand.u32 %s168, 1
          %s2435 = scalar_lea.sflag [#allocation4], %s2434
          %s2436 = sand.u32 %s168, 1
          %s2437 = smul.addr %s2436, 256
          %s2438 = scalar_lea.vmem [#allocation5], %s2437
          %2439 = dma.done %s2435, 4096
        $region60: #{bert_adapted_output.1} parent=55 // pred_fallthru
          _
      $region56: #{bert_adapted_output.1} parent=5 // pred_fallthru
        _
    $region6: #{bert_adapted_output.1} parent=1 // loop_footer
      %s22 = sadd.s32 1, %s18
    $region7: #{bert_adapted_output.1} parent=1 // loop_footer_branch
      %17 = sbr.rel target = $region3
    $region8: #{bert_adapted_output.1} parent=1 // loop_exit
      _
    %2440 = vsyncpa [#allocation3], 1
    %s2441 = scalar_lea.sflag [#allocation3], 1
    %2442 = vsyncpa %s2441, 1
    %2443 = vsyncpa [#allocation4], 1
    %s2444 = scalar_lea.sflag [#allocation4], 1
    %2445 = vsyncpa %s2444, 1

</llo_original>
